<compile_context>
chip_gen: v6e
topology: v6e:2x2x1
jax: 0.10.0
libtpu: 0.0.40
codegen_flags: <defaults>
</compile_context>

<pallas_src>
import functools

import jax
import jax.numpy as jnp
from jax import lax
from jax.experimental import pallas as pl
from jax.experimental.pallas import tpu as pltpu


def _round_up(x, m):
    return -(-x // m) * m


def _masked_layernorm(x, g, b, d_real, eps=1e-5):
    """LayerNorm over the last axis where only the first d_real lanes are data.

    Padded lanes of x must be zero; g/b are zero-padded so padded output lanes stay zero.
    """
    d_pad = x.shape[-1]
    inv_n = 1.0 / float(d_real)
    mu = jnp.sum(x, axis=-1, keepdims=True) * inv_n          # zero pad lanes don't perturb the sum
    xc = x - mu
    if d_pad != d_real:
        lane = lax.broadcasted_iota(jnp.int32, x.shape, x.ndim - 1)
        xc = jnp.where(lane < d_real, xc, 0.0)
    var = jnp.sum(xc * xc, axis=-1, keepdims=True) * inv_n
    return xc * lax.rsqrt(var + eps) * g + b


def _stream_layer_kernel(B, Lm, Ls, heads, dm, ds, hd, matmul_dtype,
                         ts_ref, res_ref, mem_ref, slab_ref,
                         wq_ref, wkv_ref, wo_ref, out_ref):
    f32 = jnp.float32
    use_cast = matmul_dtype != jnp.float32
    cast_mm = (lambda x: x.astype(matmul_dtype)) if use_cast else (lambda x: x)

    ds_pad = ts_ref.shape[-1]
    dm_pad = mem_ref.shape[-1]

    # Packed LayerNorm / bias parameter slab (one DMA instead of ten).
    slab = slab_ref[...]
    gs, bs = slab[0:1, :ds_pad], slab[1:2, :ds_pad]
    gm, bm = slab[2:3, :dm_pad], slab[3:4, :dm_pad]
    gt, bt = slab[4:5, :dm_pad], slab[5:6, :dm_pad]
    bq, bk = slab[6:7, :dm_pad], slab[7:8, :dm_pad]
    bv, bo = slab[8:9, :dm_pad], slab[9:10, :dm_pad]

    # AddNorm (single-arg stack+sum == identity) -> LayerNorm, on flat (rows, d_pad) slabs.
    stream = _masked_layernorm(ts_ref[...] + res_ref[...], gs, bs, ds)   # (B*Ls, ds_pad)
    mem_n = _masked_layernorm(mem_ref[...], gm, bm, dm)                  # (B*Lm, dm_pad)

    # Projections: one matmul for Q, one fused matmul for K|V.  1/sqrt(hd) folded into Wq/bq.
    q = jnp.dot(cast_mm(mem_n), wq_ref[...], preferred_element_type=f32) + bq    # (B*Lm, dm_pad)
    kv = jnp.dot(cast_mm(stream), wkv_ref[...], preferred_element_type=f32)      # (B*Ls, 2*dm_pad)
    k = kv[:, :dm_pad] + bk
    v = kv[:, dm_pad:] + bv

    # Leading-dim-only reshapes (last dim unchanged -> no relayout).
    q3 = q.reshape(B, Lm, dm_pad)
    k3 = k.reshape(B, Ls, dm_pad)
    v3 = v.reshape(B, Ls, dm_pad)

    # Per-head attention; head recombination folded into per-head slices of the Wo contraction.
    # Attention matmuls stay f32: at hd-sized contractions the MXU is fill/drain-bound and bf16
    # casts would only add VALU work.
    attn = jnp.zeros((B * Lm, dm_pad), f32)
    for h in range(heads):
        lo, hi = h * hd, (h + 1) * hd
        qh = q3[:, :, lo:hi]                                              # (B, Lm, hd) lane slice
        kh = k3[:, :, lo:hi]                                              # (B, Ls, hd)
        vh = v3[:, :, lo:hi]                                              # (B, Ls, hd)
        s = jnp.einsum('bqd,bkd->bqk', qh, kh, preferred_element_type=f32)   # (B, Lm, Ls)
        s = s - jnp.max(s, axis=-1, keepdims=True)
        p = jnp.exp(s)
        p = p * pl.reciprocal(jnp.sum(p, axis=-1, keepdims=True), approx=True)
        o = jnp.einsum('bqk,bkd->bqd', p, vh, preferred_element_type=f32)    # (B, Lm, hd)
        attn = attn + jnp.dot(o.reshape(B * Lm, hd), wo_ref[lo:hi, :],
                              preferred_element_type=f32)
    attn = attn + bo

    # Residual against the *normalized* memory (as in the PyTorch code), then transfer norm.
    out = _masked_layernorm(mem_n + attn, gt, bt, dm)
    out_ref[...] = out.astype(out_ref.dtype)


def stream_processing_layer(text_stream, residual, memory, params, heads,
                            *, block_batch=None, matmul_dtype=jnp.float32):
    """text_stream/residual: (N, Ls, d_stream) f32; memory: (N, Lm, d_memory) f32.

    matmul_dtype: keep float32 on v5e and for small dims; bf16 only pays off on v6e/v7x when the
    contraction dims are >= ~128.  On v7x pick block_batch so the grid has >= 2 steps (two TCs).
    """
    N, Ls, ds = text_stream.shape
    _, Lm, dm = memory.shape
    assert dm % heads == 0
    hd = dm // heads
    scale = float(hd) ** -0.5
    f32 = jnp.float32

    LANE = 128
    ds_pad = _round_up(ds, LANE)
    dm_pad = _round_up(dm, LANE)

    # ---- block_batch heuristic: target the memory-side rows; keep slabs 8-row aligned. ----
    if block_batch is None:
        B = max(1, min(N, max(1, 256 // max(Lm, 1))))
    else:
        B = max(1, min(int(block_batch), N))
    if -(-N // B) > 1:
        while B < N and ((B * Lm) % 8 or (B * Ls) % 8):
            B += 1
        if (B * Lm) % 8 or (B * Ls) % 8:
            B = N                      # single step; full-array blocks are always legal
    Np = _round_up(N, B)

    # ---- pad features (zeros) and batch (edge-replicate so LayerNorm never sees var=0). ----
    def prep(x, d_to, L):
        x = x.astype(f32)
        x = jnp.pad(x, ((0, 0), (0, 0), (0, d_to - x.shape[-1])))
        if Np != N:
            x = jnp.pad(x, ((0, Np - N), (0, 0), (0, 0)), mode="edge")
        return x.reshape(Np * L, d_to)

    ts2 = prep(text_stream, ds_pad, Ls)
    res2 = prep(residual, ds_pad, Ls)
    mem2 = prep(memory, dm_pad, Lm)

    # ---- packed parameter slab (LayerNorm params + projection biases), one input. ----
    slab_w = max(ds_pad, dm_pad)

    def rowpad(v):
        v = v.astype(f32).reshape(-1)
        return jnp.pad(v, (0, slab_w - v.shape[0]))

    slab = jnp.stack([
        rowpad(params["gs"]), rowpad(params["bs"]),
        rowpad(params["gm"]), rowpad(params["bm"]),
        rowpad(params["gt"]), rowpad(params["bt"]),
        rowpad(params["bq"] * scale),            # 1/sqrt(hd) folded into the Q projection
        rowpad(params["bk"]), rowpad(params["bv"]),
        rowpad(params["bo"]),
    ], axis=0)                                                     # (10, slab_w)

    # ---- weights: pre-transposed (in, out), zero-padded, K/V fused, scale folded into Wq. ----
    def padw(w_t, in_pad, out_pad):                                # w_t: (in, out)
        i, o = w_t.shape
        return jnp.pad(w_t.astype(f32), ((0, in_pad - i), (0, out_pad - o)))

    wq = padw(params["Wq"].T * scale, dm_pad, dm_pad).astype(matmul_dtype)     # (dm_pad, dm_pad)
    wkv = jnp.concatenate([padw(params["Wk"].T, ds_pad, dm_pad),
                           padw(params["Wv"].T, ds_pad, dm_pad)],
                          axis=1).astype(matmul_dtype)                         # (ds_pad, 2*dm_pad)
    wo = padw(params["Wo"].T, dm, dm_pad)                                      # (dm, dm_pad) f32

    spec_s = pl.BlockSpec((B * Ls, ds_pad), lambda b: (b, 0))
    spec_m = pl.BlockSpec((B * Lm, dm_pad), lambda b: (b, 0))
    const = lambda shape: pl.BlockSpec(shape, lambda b: (0, 0))    # resident params/weights

    kernel = functools.partial(_stream_layer_kernel, B, Lm, Ls, heads, dm, ds, hd, matmul_dtype)

    out2 = pl.pallas_call(
        kernel,
        out_shape=jax.ShapeDtypeStruct((Np * Lm, dm_pad), jnp.float32),
        grid=(Np // B,),
        in_specs=[spec_s, spec_s, spec_m,
                  const(slab.shape), const(wq.shape), const(wkv.shape), const(wo.shape)],
        out_specs=spec_m,
        compiler_params=pltpu.CompilerParams(
            dimension_semantics=("parallel",),
            vmem_limit_bytes=48 * 1024 * 1024),
    )(ts2, res2, mem2, slab, wq, wkv, wo)

    return out2.reshape(Np, Lm, dm_pad)[:N, :, :dm]


def reference(text_stream, residual, memory, params, heads):
    """Pure-JAX reference of the same forward pass (eval-mode MHA)."""
    def ln(x, g, b, eps=1e-5):
        mu = x.mean(-1, keepdims=True)
        var = ((x - mu) ** 2).mean(-1, keepdims=True)
        return (x - mu) / jnp.sqrt(var + eps) * g + b

    stream = ln(text_stream + residual, params["gs"], params["bs"])
    mem_n = ln(memory, params["gm"], params["bm"])

    q = jnp.einsum("nld,ed->nle", mem_n, params["Wq"]) + params["bq"]
    k = jnp.einsum("nld,ed->nle", stream, params["Wk"]) + params["bk"]
    v = jnp.einsum("nld,ed->nle", stream, params["Wv"]) + params["bv"]

    N, Lm, dm = q.shape
    Ls = k.shape[1]
    hd = dm // heads
    qh = q.reshape(N, Lm, heads, hd).transpose(0, 2, 1, 3)
    kh = k.reshape(N, Ls, heads, hd).transpose(0, 2, 1, 3)
    vh = v.reshape(N, Ls, heads, hd).transpose(0, 2, 1, 3)
    s = jnp.einsum("nhqd,nhkd->nhqk", qh, kh) / jnp.sqrt(jnp.float32(hd))
    p = jax.nn.softmax(s, axis=-1)
    o = jnp.einsum("nhqk,nhkd->nhqd", p, vh).transpose(0, 2, 1, 3).reshape(N, Lm, dm)
    attn = jnp.einsum("nld,ed->nle", o, params["Wo"]) + params["bo"]
    return ln(mem_n + attn, params["gt"], params["bt"])


if __name__ == "__main__":
    # Small shapes consistent with the module (block_batch=2 -> a 2-step "parallel" grid).
    N, Ls, Lm = 4, 8, 4
    d_stream, d_memory, heads = 24, 32, 4

    key = jax.random.PRNGKey(0)
    ks = jax.random.split(key, 16)

    text_stream = jax.random.normal(ks[0], (N, Ls, d_stream), jnp.float32)
    residual = jax.random.normal(ks[1], (N, Ls, d_stream), jnp.float32)
    memory = jax.random.normal(ks[2], (N, Lm, d_memory), jnp.float32)

    params = {
        # LayerNorm params (intake stream / intake memory / transfer-into-memory)
        "gs": 1.0 + 0.1 * jax.random.normal(ks[3], (d_stream,), jnp.float32),
        "bs": 0.1 * jax.random.normal(ks[4], (d_stream,), jnp.float32),
        "gm": 1.0 + 0.1 * jax.random.normal(ks[5], (d_memory,), jnp.float32),
        "bm": 0.1 * jax.random.normal(ks[6], (d_memory,), jnp.float32),
        "gt": 1.0 + 0.1 * jax.random.normal(ks[7], (d_memory,), jnp.float32),
        "bt": 0.1 * jax.random.normal(ks[8], (d_memory,), jnp.float32),
        # MHA stream2memory: embed=d_memory, kdim=vdim=d_stream
        "Wq": 0.1 * jax.random.normal(ks[9], (d_memory, d_memory), jnp.float32),
        "Wk": 0.1 * jax.random.normal(ks[10], (d_memory, d_stream), jnp.float32),
        "Wv": 0.1 * jax.random.normal(ks[11], (d_memory, d_stream), jnp.float32),
        "bq": 0.1 * jax.random.normal(ks[12], (d_memory,), jnp.float32),
        "bk": 0.1 * jax.random.normal(ks[13], (d_memory,), jnp.float32),
        "bv": 0.1 * jax.random.normal(ks[14], (d_memory,), jnp.float32),
        "Wo": 0.1 * jax.random.normal(ks[15], (d_memory, d_memory), jnp.float32),
        "bo": jnp.zeros((d_memory,), jnp.float32),
    }

    ref = reference(text_stream, residual, memory, params, heads)

    # f32 MXU operands (tight check; only deviation is the EUP approx reciprocal in softmax).
    out = stream_processing_layer(text_stream, residual, memory, params, heads, block_batch=2)
    out = jax.block_until_ready(out)
    assert out.shape == (N, Lm, d_memory)
    err = float(jnp.max(jnp.abs(out - ref)))
    assert jnp.allclose(out, ref, rtol=5e-3, atol=5e-3), err

    # bf16 projection operands (v6e/v7x fast path for large dims); looser tolerance.
    out_bf = stream_processing_layer(text_stream, residual, memory, params, heads,
                                     block_batch=2, matmul_dtype=jnp.bfloat16)
    out_bf = jax.block_until_ready(out_bf)
    err_bf = float(jnp.max(jnp.abs(out_bf - ref)))
    assert jnp.allclose(out_bf, ref, rtol=1e-1, atol=1e-1), err_bf

    print("KERNEL_OK")
</pallas_src>

<mosaic_0001>
module attributes {stable_mosaic.version = 11 : i64} {
  func.func @_stream_layer_kernel(%arg0: i32, %arg1: memref<16x128xf32, #tpu.memory_space<vmem>>, %arg2: memref<16x128xf32, #tpu.memory_space<vmem>>, %arg3: memref<8x128xf32, #tpu.memory_space<vmem>>, %arg4: memref<10x128xf32, #tpu.memory_space<vmem>>, %arg5: memref<128x128xf32, #tpu.memory_space<vmem>>, %arg6: memref<128x256xf32, #tpu.memory_space<vmem>>, %arg7: memref<32x128xf32, #tpu.memory_space<vmem>>, %arg8: memref<8x128xf32, #tpu.memory_space<vmem>>) attributes {dimension_semantics = [#tpu.dimension_semantics<parallel>], iteration_bounds = array<i64: 2>, scalar_prefetch = 0 : i64, scratch_operands = 0 : i64, tpu.core_type = #tpu.core_type<tc>, window_params = [{transform_indices = @transform_0, window_bounds = array<i64: 16, 128>}, {transform_indices = @transform_1, window_bounds = array<i64: 16, 128>}, {transform_indices = @transform_2, window_bounds = array<i64: 8, 128>}, {pipeline_mode = #tpu.pipeline_mode<synchronous>, transform_indices = @transform_3, window_bounds = array<i64: 10, 128>}, {pipeline_mode = #tpu.pipeline_mode<synchronous>, transform_indices = @transform_4, window_bounds = array<i64: 128, 128>}, {pipeline_mode = #tpu.pipeline_mode<synchronous>, transform_indices = @transform_5, window_bounds = array<i64: 128, 256>}, {pipeline_mode = #tpu.pipeline_mode<synchronous>, transform_indices = @transform_6, window_bounds = array<i64: 32, 128>}, {transform_indices = @transform_7, window_bounds = array<i64: 8, 128>}]} {
    %c0 = arith.constant 0 : index
    %c0_0 = arith.constant 0 : index
    %0 = vector.load %arg4[%c0, %c0_0] : memref<10x128xf32, #tpu.memory_space<vmem>>, vector<10x128xf32>
    %1 = vector.extract_strided_slice %0 {offsets = [0, 0], sizes = [1, 128], strides = [1, 1]} : vector<10x128xf32> to vector<1x128xf32>
    %2 = vector.extract_strided_slice %0 {offsets = [1, 0], sizes = [1, 128], strides = [1, 1]} : vector<10x128xf32> to vector<1x128xf32>
    %3 = vector.extract_strided_slice %0 {offsets = [2, 0], sizes = [1, 128], strides = [1, 1]} : vector<10x128xf32> to vector<1x128xf32>
    %4 = vector.extract_strided_slice %0 {offsets = [3, 0], sizes = [1, 128], strides = [1, 1]} : vector<10x128xf32> to vector<1x128xf32>
    %5 = vector.extract_strided_slice %0 {offsets = [4, 0], sizes = [1, 128], strides = [1, 1]} : vector<10x128xf32> to vector<1x128xf32>
    %6 = vector.extract_strided_slice %0 {offsets = [5, 0], sizes = [1, 128], strides = [1, 1]} : vector<10x128xf32> to vector<1x128xf32>
    %7 = vector.extract_strided_slice %0 {offsets = [6, 0], sizes = [1, 128], strides = [1, 1]} : vector<10x128xf32> to vector<1x128xf32>
    %8 = vector.extract_strided_slice %0 {offsets = [7, 0], sizes = [1, 128], strides = [1, 1]} : vector<10x128xf32> to vector<1x128xf32>
    %9 = vector.extract_strided_slice %0 {offsets = [8, 0], sizes = [1, 128], strides = [1, 1]} : vector<10x128xf32> to vector<1x128xf32>
    %10 = vector.extract_strided_slice %0 {offsets = [9, 0], sizes = [1, 128], strides = [1, 1]} : vector<10x128xf32> to vector<1x128xf32>
    %c0_1 = arith.constant 0 : index
    %c0_2 = arith.constant 0 : index
    %11 = vector.load %arg1[%c0_1, %c0_2] : memref<16x128xf32, #tpu.memory_space<vmem>>, vector<16x128xf32>
    %c0_3 = arith.constant 0 : index
    %c0_4 = arith.constant 0 : index
    %12 = vector.load %arg2[%c0_3, %c0_4] : memref<16x128xf32, #tpu.memory_space<vmem>>, vector<16x128xf32>
    %13 = arith.addf %11, %12 : vector<16x128xf32>
    %cst = arith.constant dense<0.000000e+00> : vector<16xf32>
    %14 = vector.multi_reduction <add>, %13, %cst [1] : vector<16x128xf32> to vector<16xf32>
    %15 = vector.shape_cast %14 : vector<16xf32> to vector<16x1xf32>
    %cst_5 = arith.constant 0.0416666679 : f32
    %16 = vector.broadcast %cst_5 : f32 to vector<16x1xf32>
    %17 = arith.mulf %15, %16 : vector<16x1xf32>
    %18 = vector.broadcast %17 : vector<16x1xf32> to vector<16x128xf32>
    %19 = arith.subf %13, %18 : vector<16x128xf32>
    %20 = tpu.iota {dimensions = array<i32: 1>} : vector<16x128xi32>
    %c24_i32 = arith.constant 24 : i32
    %21 = vector.broadcast %c24_i32 : i32 to vector<16x128xi32>
    %22 = arith.cmpi slt, %20, %21 : vector<16x128xi32>
    %cst_6 = arith.constant 0.000000e+00 : f32
    %23 = vector.broadcast %cst_6 : f32 to vector<16x128xf32>
    %24 = arith.select %22, %19, %23 : vector<16x128xi1>, vector<16x128xf32>
    %25 = arith.mulf %24, %24 : vector<16x128xf32>
    %cst_7 = arith.constant dense<0.000000e+00> : vector<16xf32>
    %26 = vector.multi_reduction <add>, %25, %cst_7 [1] : vector<16x128xf32> to vector<16xf32>
    %27 = vector.shape_cast %26 : vector<16xf32> to vector<16x1xf32>
    %cst_8 = arith.constant 0.0416666679 : f32
    %28 = vector.broadcast %cst_8 : f32 to vector<16x1xf32>
    %29 = arith.mulf %27, %28 : vector<16x1xf32>
    %cst_9 = arith.constant 9.99999974E-6 : f32
    %30 = vector.broadcast %cst_9 : f32 to vector<16x1xf32>
    %31 = arith.addf %29, %30 : vector<16x1xf32>
    %32 = math.rsqrt %31 : vector<16x1xf32>
    %33 = vector.broadcast %32 : vector<16x1xf32> to vector<16x128xf32>
    %34 = arith.mulf %24, %33 : vector<16x128xf32>
    %35 = vector.broadcast %1 : vector<1x128xf32> to vector<16x128xf32>
    %36 = arith.mulf %34, %35 : vector<16x128xf32>
    %37 = vector.broadcast %2 : vector<1x128xf32> to vector<16x128xf32>
    %38 = arith.addf %36, %37 : vector<16x128xf32>
    %c0_10 = arith.constant 0 : index
    %c0_11 = arith.constant 0 : index
    %39 = vector.load %arg3[%c0_10, %c0_11] : memref<8x128xf32, #tpu.memory_space<vmem>>, vector<8x128xf32>
    %cst_12 = arith.constant dense<0.000000e+00> : vector<8xf32>
    %40 = vector.multi_reduction <add>, %39, %cst_12 [1] : vector<8x128xf32> to vector<8xf32>
    %41 = vector.shape_cast %40 : vector<8xf32> to vector<8x1xf32>
    %cst_13 = arith.constant 3.125000e-02 : f32
    %42 = vector.broadcast %cst_13 : f32 to vector<8x1xf32>
    %43 = arith.mulf %41, %42 : vector<8x1xf32>
    %44 = vector.broadcast %43 : vector<8x1xf32> to vector<8x128xf32>
    %45 = arith.subf %39, %44 : vector<8x128xf32>
    %46 = tpu.iota {dimensions = array<i32: 1>} : vector<8x128xi32>
    %c32_i32 = arith.constant 32 : i32
    %47 = vector.broadcast %c32_i32 : i32 to vector<8x128xi32>
    %48 = arith.cmpi slt, %46, %47 : vector<8x128xi32>
    %cst_14 = arith.constant 0.000000e+00 : f32
    %49 = vector.broadcast %cst_14 : f32 to vector<8x128xf32>
    %50 = arith.select %48, %45, %49 : vector<8x128xi1>, vector<8x128xf32>
    %51 = arith.mulf %50, %50 : vector<8x128xf32>
    %cst_15 = arith.constant dense<0.000000e+00> : vector<8xf32>
    %52 = vector.multi_reduction <add>, %51, %cst_15 [1] : vector<8x128xf32> to vector<8xf32>
    %53 = vector.shape_cast %52 : vector<8xf32> to vector<8x1xf32>
    %cst_16 = arith.constant 3.125000e-02 : f32
    %54 = vector.broadcast %cst_16 : f32 to vector<8x1xf32>
    %55 = arith.mulf %53, %54 : vector<8x1xf32>
    %cst_17 = arith.constant 9.99999974E-6 : f32
    %56 = vector.broadcast %cst_17 : f32 to vector<8x1xf32>
    %57 = arith.addf %55, %56 : vector<8x1xf32>
    %58 = math.rsqrt %57 : vector<8x1xf32>
    %59 = vector.broadcast %58 : vector<8x1xf32> to vector<8x128xf32>
    %60 = arith.mulf %50, %59 : vector<8x128xf32>
    %61 = vector.broadcast %3 : vector<1x128xf32> to vector<8x128xf32>
    %62 = arith.mulf %60, %61 : vector<8x128xf32>
    %63 = vector.broadcast %4 : vector<1x128xf32> to vector<8x128xf32>
    %64 = arith.addf %62, %63 : vector<8x128xf32>
    %c0_18 = arith.constant 0 : index
    %c0_19 = arith.constant 0 : index
    %65 = vector.load %arg5[%c0_18, %c0_19] : memref<128x128xf32, #tpu.memory_space<vmem>>, vector<128x128xf32>
    %cst_20 = arith.constant dense<0.000000e+00> : vector<8x128xf32>
    %66 = tpu.matmul %64, %65, %cst_20 {dimension_numbers = #tpu.dot_dimension_numbers<[1], [0], [0], [1], [0, 0, 1, 1], [], []>} : vector<8x128xf32>, vector<128x128xf32>, vector<8x128xf32> -> vector<8x128xf32>
    %67 = vector.broadcast %7 : vector<1x128xf32> to vector<8x128xf32>
    %68 = arith.addf %66, %67 : vector<8x128xf32>
    %c0_21 = arith.constant 0 : index
    %c0_22 = arith.constant 0 : index
    %69 = vector.load %arg6[%c0_21, %c0_22] : memref<128x256xf32, #tpu.memory_space<vmem>>, vector<128x256xf32>
    %cst_23 = arith.constant dense<0.000000e+00> : vector<16x256xf32>
    %70 = tpu.matmul %38, %69, %cst_23 {dimension_numbers = #tpu.dot_dimension_numbers<[1], [0], [0], [1], [0, 0, 1, 1], [], []>} : vector<16x128xf32>, vector<128x256xf32>, vector<16x256xf32> -> vector<16x256xf32>
    %71 = vector.extract_strided_slice %70 {offsets = [0, 0], sizes = [16, 128], strides = [1, 1]} : vector<16x256xf32> to vector<16x128xf32>
    %72 = vector.broadcast %8 : vector<1x128xf32> to vector<16x128xf32>
    %73 = arith.addf %71, %72 : vector<16x128xf32>
    %74 = vector.extract_strided_slice %70 {offsets = [0, 128], sizes = [16, 128], strides = [1, 1]} : vector<16x256xf32> to vector<16x128xf32>
    %75 = vector.broadcast %9 : vector<1x128xf32> to vector<16x128xf32>
    %76 = arith.addf %74, %75 : vector<16x128xf32>
    %77 = vector.shape_cast %68 : vector<8x128xf32> to vector<2x4x128xf32>
    %78 = vector.shape_cast %73 : vector<16x128xf32> to vector<2x8x128xf32>
    %79 = vector.shape_cast %76 : vector<16x128xf32> to vector<2x8x128xf32>
    %cst_24 = arith.constant 0.000000e+00 : f32
    %80 = vector.broadcast %cst_24 : f32 to vector<8x128xf32>
    %81 = vector.extract_strided_slice %77 {offsets = [0, 0, 0], sizes = [2, 4, 8], strides = [1, 1, 1]} : vector<2x4x128xf32> to vector<2x4x8xf32>
    %82 = vector.extract_strided_slice %78 {offsets = [0, 0, 0], sizes = [2, 8, 8], strides = [1, 1, 1]} : vector<2x8x128xf32> to vector<2x8x8xf32>
    %83 = vector.extract_strided_slice %79 {offsets = [0, 0, 0], sizes = [2, 8, 8], strides = [1, 1, 1]} : vector<2x8x128xf32> to vector<2x8x8xf32>
    "tpu.trace_start"() <{level = 10 : i32, message = "bqd,bkd->bqk"}> : () -> ()
    %cst_25 = arith.constant dense<0.000000e+00> : vector<2x4x8xf32>
    %84 = tpu.matmul %81, %82, %cst_25 {dimension_numbers = #tpu.dot_dimension_numbers<[2], [2], [1], [1], [0, 0, 0, 1, 1, 1], [0], [0]>} : vector<2x4x8xf32>, vector<2x8x8xf32>, vector<2x4x8xf32> -> vector<2x4x8xf32>
    "tpu.trace_stop"() : () -> ()
    %cst_26 = arith.constant dense<0xFF800000> : vector<2x4xf32>
    %85 = vector.multi_reduction <maximumf>, %84, %cst_26 [2] : vector<2x4x8xf32> to vector<2x4xf32>
    %86 = vector.shape_cast %85 : vector<2x4xf32> to vector<2x4x1xf32>
    %87 = vector.broadcast %86 : vector<2x4x1xf32> to vector<2x4x8xf32>
    %88 = arith.subf %84, %87 : vector<2x4x8xf32>
    %89 = math.exp %88 : vector<2x4x8xf32>
    %cst_27 = arith.constant dense<0.000000e+00> : vector<2x4xf32>
    %90 = vector.multi_reduction <add>, %89, %cst_27 [2] : vector<2x4x8xf32> to vector<2x4xf32>
    %91 = vector.shape_cast %90 : vector<2x4xf32> to vector<2x4x1xf32>
    %92 = tpu.reciprocal %91 {approx = true} : vector<2x4x1xf32> -> vector<2x4x1xf32>
    %93 = vector.broadcast %92 : vector<2x4x1xf32> to vector<2x4x8xf32>
    %94 = arith.mulf %89, %93 : vector<2x4x8xf32>
    "tpu.trace_start"() <{level = 10 : i32, message = "bqk,bkd->bqd"}> : () -> ()
    %cst_28 = arith.constant dense<0.000000e+00> : vector<2x4x8xf32>
    %95 = tpu.matmul %94, %83, %cst_28 {dimension_numbers = #tpu.dot_dimension_numbers<[2], [1], [1], [2], [0, 0, 0, 1, 1, 2], [0], [0]>} : vector<2x4x8xf32>, vector<2x8x8xf32>, vector<2x4x8xf32> -> vector<2x4x8xf32>
    "tpu.trace_stop"() : () -> ()
    %96 = vector.shape_cast %95 : vector<2x4x8xf32> to vector<8x8xf32>
    %c0_29 = arith.constant 0 : index
    %c0_30 = arith.constant 0 : index
    %97 = vector.load %arg7[%c0_29, %c0_30] : memref<32x128xf32, #tpu.memory_space<vmem>>, vector<8x128xf32>
    %cst_31 = arith.constant dense<0.000000e+00> : vector<8x128xf32>
    %98 = tpu.matmul %96, %97, %cst_31 {dimension_numbers = #tpu.dot_dimension_numbers<[1], [0], [0], [1], [0, 0, 1, 1], [], []>} : vector<8x8xf32>, vector<8x128xf32>, vector<8x128xf32> -> vector<8x128xf32>
    %99 = arith.addf %80, %98 : vector<8x128xf32>
    %100 = vector.extract_strided_slice %77 {offsets = [0, 0, 8], sizes = [2, 4, 8], strides = [1, 1, 1]} : vector<2x4x128xf32> to vector<2x4x8xf32>
    %101 = vector.extract_strided_slice %78 {offsets = [0, 0, 8], sizes = [2, 8, 8], strides = [1, 1, 1]} : vector<2x8x128xf32> to vector<2x8x8xf32>
    %102 = vector.extract_strided_slice %79 {offsets = [0, 0, 8], sizes = [2, 8, 8], strides = [1, 1, 1]} : vector<2x8x128xf32> to vector<2x8x8xf32>
    "tpu.trace_start"() <{level = 10 : i32, message = "bqd,bkd->bqk"}> : () -> ()
    %cst_32 = arith.constant dense<0.000000e+00> : vector<2x4x8xf32>
    %103 = tpu.matmul %100, %101, %cst_32 {dimension_numbers = #tpu.dot_dimension_numbers<[2], [2], [1], [1], [0, 0, 0, 1, 1, 1], [0], [0]>} : vector<2x4x8xf32>, vector<2x8x8xf32>, vector<2x4x8xf32> -> vector<2x4x8xf32>
    "tpu.trace_stop"() : () -> ()
    %cst_33 = arith.constant dense<0xFF800000> : vector<2x4xf32>
    %104 = vector.multi_reduction <maximumf>, %103, %cst_33 [2] : vector<2x4x8xf32> to vector<2x4xf32>
    %105 = vector.shape_cast %104 : vector<2x4xf32> to vector<2x4x1xf32>
    %106 = vector.broadcast %105 : vector<2x4x1xf32> to vector<2x4x8xf32>
    %107 = arith.subf %103, %106 : vector<2x4x8xf32>
    %108 = math.exp %107 : vector<2x4x8xf32>
    %cst_34 = arith.constant dense<0.000000e+00> : vector<2x4xf32>
    %109 = vector.multi_reduction <add>, %108, %cst_34 [2] : vector<2x4x8xf32> to vector<2x4xf32>
    %110 = vector.shape_cast %109 : vector<2x4xf32> to vector<2x4x1xf32>
    %111 = tpu.reciprocal %110 {approx = true} : vector<2x4x1xf32> -> vector<2x4x1xf32>
    %112 = vector.broadcast %111 : vector<2x4x1xf32> to vector<2x4x8xf32>
    %113 = arith.mulf %108, %112 : vector<2x4x8xf32>
    "tpu.trace_start"() <{level = 10 : i32, message = "bqk,bkd->bqd"}> : () -> ()
    %cst_35 = arith.constant dense<0.000000e+00> : vector<2x4x8xf32>
    %114 = tpu.matmul %113, %102, %cst_35 {dimension_numbers = #tpu.dot_dimension_numbers<[2], [1], [1], [2], [0, 0, 0, 1, 1, 2], [0], [0]>} : vector<2x4x8xf32>, vector<2x8x8xf32>, vector<2x4x8xf32> -> vector<2x4x8xf32>
    "tpu.trace_stop"() : () -> ()
    %115 = vector.shape_cast %114 : vector<2x4x8xf32> to vector<8x8xf32>
    %c8 = arith.constant 8 : index
    %c0_36 = arith.constant 0 : index
    %116 = vector.load %arg7[%c8, %c0_36] : memref<32x128xf32, #tpu.memory_space<vmem>>, vector<8x128xf32>
    %cst_37 = arith.constant dense<0.000000e+00> : vector<8x128xf32>
    %117 = tpu.matmul %115, %116, %cst_37 {dimension_numbers = #tpu.dot_dimension_numbers<[1], [0], [0], [1], [0, 0, 1, 1], [], []>} : vector<8x8xf32>, vector<8x128xf32>, vector<8x128xf32> -> vector<8x128xf32>
    %118 = arith.addf %99, %117 : vector<8x128xf32>
    %119 = vector.extract_strided_slice %77 {offsets = [0, 0, 16], sizes = [2, 4, 8], strides = [1, 1, 1]} : vector<2x4x128xf32> to vector<2x4x8xf32>
    %120 = vector.extract_strided_slice %78 {offsets = [0, 0, 16], sizes = [2, 8, 8], strides = [1, 1, 1]} : vector<2x8x128xf32> to vector<2x8x8xf32>
    %121 = vector.extract_strided_slice %79 {offsets = [0, 0, 16], sizes = [2, 8, 8], strides = [1, 1, 1]} : vector<2x8x128xf32> to vector<2x8x8xf32>
    "tpu.trace_start"() <{level = 10 : i32, message = "bqd,bkd->bqk"}> : () -> ()
    %cst_38 = arith.constant dense<0.000000e+00> : vector<2x4x8xf32>
    %122 = tpu.matmul %119, %120, %cst_38 {dimension_numbers = #tpu.dot_dimension_numbers<[2], [2], [1], [1], [0, 0, 0, 1, 1, 1], [0], [0]>} : vector<2x4x8xf32>, vector<2x8x8xf32>, vector<2x4x8xf32> -> vector<2x4x8xf32>
    "tpu.trace_stop"() : () -> ()
    %cst_39 = arith.constant dense<0xFF800000> : vector<2x4xf32>
    %123 = vector.multi_reduction <maximumf>, %122, %cst_39 [2] : vector<2x4x8xf32> to vector<2x4xf32>
    %124 = vector.shape_cast %123 : vector<2x4xf32> to vector<2x4x1xf32>
    %125 = vector.broadcast %124 : vector<2x4x1xf32> to vector<2x4x8xf32>
    %126 = arith.subf %122, %125 : vector<2x4x8xf32>
    %127 = math.exp %126 : vector<2x4x8xf32>
    %cst_40 = arith.constant dense<0.000000e+00> : vector<2x4xf32>
    %128 = vector.multi_reduction <add>, %127, %cst_40 [2] : vector<2x4x8xf32> to vector<2x4xf32>
    %129 = vector.shape_cast %128 : vector<2x4xf32> to vector<2x4x1xf32>
    %130 = tpu.reciprocal %129 {approx = true} : vector<2x4x1xf32> -> vector<2x4x1xf32>
    %131 = vector.broadcast %130 : vector<2x4x1xf32> to vector<2x4x8xf32>
    %132 = arith.mulf %127, %131 : vector<2x4x8xf32>
    "tpu.trace_start"() <{level = 10 : i32, message = "bqk,bkd->bqd"}> : () -> ()
    %cst_41 = arith.constant dense<0.000000e+00> : vector<2x4x8xf32>
    %133 = tpu.matmul %132, %121, %cst_41 {dimension_numbers = #tpu.dot_dimension_numbers<[2], [1], [1], [2], [0, 0, 0, 1, 1, 2], [0], [0]>} : vector<2x4x8xf32>, vector<2x8x8xf32>, vector<2x4x8xf32> -> vector<2x4x8xf32>
    "tpu.trace_stop"() : () -> ()
    %134 = vector.shape_cast %133 : vector<2x4x8xf32> to vector<8x8xf32>
    %c16 = arith.constant 16 : index
    %c0_42 = arith.constant 0 : index
    %135 = vector.load %arg7[%c16, %c0_42] : memref<32x128xf32, #tpu.memory_space<vmem>>, vector<8x128xf32>
    %cst_43 = arith.constant dense<0.000000e+00> : vector<8x128xf32>
    %136 = tpu.matmul %134, %135, %cst_43 {dimension_numbers = #tpu.dot_dimension_numbers<[1], [0], [0], [1], [0, 0, 1, 1], [], []>} : vector<8x8xf32>, vector<8x128xf32>, vector<8x128xf32> -> vector<8x128xf32>
    %137 = arith.addf %118, %136 : vector<8x128xf32>
    %138 = vector.extract_strided_slice %77 {offsets = [0, 0, 24], sizes = [2, 4, 8], strides = [1, 1, 1]} : vector<2x4x128xf32> to vector<2x4x8xf32>
    %139 = vector.extract_strided_slice %78 {offsets = [0, 0, 24], sizes = [2, 8, 8], strides = [1, 1, 1]} : vector<2x8x128xf32> to vector<2x8x8xf32>
    %140 = vector.extract_strided_slice %79 {offsets = [0, 0, 24], sizes = [2, 8, 8], strides = [1, 1, 1]} : vector<2x8x128xf32> to vector<2x8x8xf32>
    "tpu.trace_start"() <{level = 10 : i32, message = "bqd,bkd->bqk"}> : () -> ()
    %cst_44 = arith.constant dense<0.000000e+00> : vector<2x4x8xf32>
    %141 = tpu.matmul %138, %139, %cst_44 {dimension_numbers = #tpu.dot_dimension_numbers<[2], [2], [1], [1], [0, 0, 0, 1, 1, 1], [0], [0]>} : vector<2x4x8xf32>, vector<2x8x8xf32>, vector<2x4x8xf32> -> vector<2x4x8xf32>
    "tpu.trace_stop"() : () -> ()
    %cst_45 = arith.constant dense<0xFF800000> : vector<2x4xf32>
    %142 = vector.multi_reduction <maximumf>, %141, %cst_45 [2] : vector<2x4x8xf32> to vector<2x4xf32>
    %143 = vector.shape_cast %142 : vector<2x4xf32> to vector<2x4x1xf32>
    %144 = vector.broadcast %143 : vector<2x4x1xf32> to vector<2x4x8xf32>
    %145 = arith.subf %141, %144 : vector<2x4x8xf32>
    %146 = math.exp %145 : vector<2x4x8xf32>
    %cst_46 = arith.constant dense<0.000000e+00> : vector<2x4xf32>
    %147 = vector.multi_reduction <add>, %146, %cst_46 [2] : vector<2x4x8xf32> to vector<2x4xf32>
    %148 = vector.shape_cast %147 : vector<2x4xf32> to vector<2x4x1xf32>
    %149 = tpu.reciprocal %148 {approx = true} : vector<2x4x1xf32> -> vector<2x4x1xf32>
    %150 = vector.broadcast %149 : vector<2x4x1xf32> to vector<2x4x8xf32>
    %151 = arith.mulf %146, %150 : vector<2x4x8xf32>
    "tpu.trace_start"() <{level = 10 : i32, message = "bqk,bkd->bqd"}> : () -> ()
    %cst_47 = arith.constant dense<0.000000e+00> : vector<2x4x8xf32>
    %152 = tpu.matmul %151, %140, %cst_47 {dimension_numbers = #tpu.dot_dimension_numbers<[2], [1], [1], [2], [0, 0, 0, 1, 1, 2], [0], [0]>} : vector<2x4x8xf32>, vector<2x8x8xf32>, vector<2x4x8xf32> -> vector<2x4x8xf32>
    "tpu.trace_stop"() : () -> ()
    %153 = vector.shape_cast %152 : vector<2x4x8xf32> to vector<8x8xf32>
    %c24 = arith.constant 24 : index
    %c0_48 = arith.constant 0 : index
    %154 = vector.load %arg7[%c24, %c0_48] : memref<32x128xf32, #tpu.memory_space<vmem>>, vector<8x128xf32>
    %cst_49 = arith.constant dense<0.000000e+00> : vector<8x128xf32>
    %155 = tpu.matmul %153, %154, %cst_49 {dimension_numbers = #tpu.dot_dimension_numbers<[1], [0], [0], [1], [0, 0, 1, 1], [], []>} : vector<8x8xf32>, vector<8x128xf32>, vector<8x128xf32> -> vector<8x128xf32>
    %156 = arith.addf %137, %155 : vector<8x128xf32>
    %157 = vector.broadcast %10 : vector<1x128xf32> to vector<8x128xf32>
    %158 = arith.addf %156, %157 : vector<8x128xf32>
    %159 = arith.addf %64, %158 : vector<8x128xf32>
    %cst_50 = arith.constant dense<0.000000e+00> : vector<8xf32>
    %160 = vector.multi_reduction <add>, %159, %cst_50 [1] : vector<8x128xf32> to vector<8xf32>
    %161 = vector.shape_cast %160 : vector<8xf32> to vector<8x1xf32>
    %cst_51 = arith.constant 3.125000e-02 : f32
    %162 = vector.broadcast %cst_51 : f32 to vector<8x1xf32>
    %163 = arith.mulf %161, %162 : vector<8x1xf32>
    %164 = vector.broadcast %163 : vector<8x1xf32> to vector<8x128xf32>
    %165 = arith.subf %159, %164 : vector<8x128xf32>
    %166 = tpu.iota {dimensions = array<i32: 1>} : vector<8x128xi32>
    %c32_i32_52 = arith.constant 32 : i32
    %167 = vector.broadcast %c32_i32_52 : i32 to vector<8x128xi32>
    %168 = arith.cmpi slt, %166, %167 : vector<8x128xi32>
    %cst_53 = arith.constant 0.000000e+00 : f32
    %169 = vector.broadcast %cst_53 : f32 to vector<8x128xf32>
    %170 = arith.select %168, %165, %169 : vector<8x128xi1>, vector<8x128xf32>
    %171 = arith.mulf %170, %170 : vector<8x128xf32>
    %cst_54 = arith.constant dense<0.000000e+00> : vector<8xf32>
    %172 = vector.multi_reduction <add>, %171, %cst_54 [1] : vector<8x128xf32> to vector<8xf32>
    %173 = vector.shape_cast %172 : vector<8xf32> to vector<8x1xf32>
    %cst_55 = arith.constant 3.125000e-02 : f32
    %174 = vector.broadcast %cst_55 : f32 to vector<8x1xf32>
    %175 = arith.mulf %173, %174 : vector<8x1xf32>
    %cst_56 = arith.constant 9.99999974E-6 : f32
    %176 = vector.broadcast %cst_56 : f32 to vector<8x1xf32>
    %177 = arith.addf %175, %176 : vector<8x1xf32>
    %178 = math.rsqrt %177 : vector<8x1xf32>
    %179 = vector.broadcast %178 : vector<8x1xf32> to vector<8x128xf32>
    %180 = arith.mulf %170, %179 : vector<8x128xf32>
    %181 = vector.broadcast %5 : vector<1x128xf32> to vector<8x128xf32>
    %182 = arith.mulf %180, %181 : vector<8x128xf32>
    %183 = vector.broadcast %6 : vector<1x128xf32> to vector<8x128xf32>
    %184 = arith.addf %182, %183 : vector<8x128xf32>
    %c0_57 = arith.constant 0 : index
    %c0_58 = arith.constant 0 : index
    %185 = vector.load %arg8[%c0_57, %c0_58] : memref<8x128xf32, #tpu.memory_space<vmem>>, vector<8x128xf32>
    tpu.vector_store %arg8[%c0_57, %c0_58], %184 {strides = array<i32>} : memref<8x128xf32, #tpu.memory_space<vmem>>, vector<8x128xf32>,
    return
  }
  func.func @transform_0(%arg0: i32) -> (i32, i32) {
    %c0_i32 = arith.constant 0 : i32
    %c0_i32_0 = arith.constant 0 : i32
    return %arg0, %c0_i32 : i32, i32
  }
  func.func @transform_1(%arg0: i32) -> (i32, i32) {
    %c0_i32 = arith.constant 0 : i32
    %c0_i32_0 = arith.constant 0 : i32
    return %arg0, %c0_i32 : i32, i32
  }
  func.func @transform_2(%arg0: i32) -> (i32, i32) {
    %c0_i32 = arith.constant 0 : i32
    %c0_i32_0 = arith.constant 0 : i32
    return %arg0, %c0_i32 : i32, i32
  }
  func.func @transform_3(%arg0: i32) -> (i32, i32) {
    %c0_i32 = arith.constant 0 : i32
    %c0_i32_0 = arith.constant 0 : i32
    %c0_i32_1 = arith.constant 0 : i32
    return %c0_i32, %c0_i32_0 : i32, i32
  }
  func.func @transform_4(%arg0: i32) -> (i32, i32) {
    %c0_i32 = arith.constant 0 : i32
    %c0_i32_0 = arith.constant 0 : i32
    %c0_i32_1 = arith.constant 0 : i32
    return %c0_i32, %c0_i32_0 : i32, i32
  }
  func.func @transform_5(%arg0: i32) -> (i32, i32) {
    %c0_i32 = arith.constant 0 : i32
    %c0_i32_0 = arith.constant 0 : i32
    %c0_i32_1 = arith.constant 0 : i32
    return %c0_i32, %c0_i32_0 : i32, i32
  }
  func.func @transform_6(%arg0: i32) -> (i32, i32) {
    %c0_i32 = arith.constant 0 : i32
    %c0_i32_0 = arith.constant 0 : i32
    %c0_i32_1 = arith.constant 0 : i32
    return %c0_i32, %c0_i32_0 : i32, i32
  }
  func.func @transform_7(%arg0: i32) -> (i32, i32) {
    %c0_i32 = arith.constant 0 : i32
    %c0_i32_0 = arith.constant 0 : i32
    return %arg0, %c0_i32 : i32, i32
  }
}

</mosaic_0001>

<llo_original>
// kernel: tpu_custom_call.1
$region0: #{tpu_custom_call.1}
  #allocation0 [shape = 'u32[]', space=smem, size = 0x4, offset = 0x4, fixed_abs, tag = 'smem constant byte address 0x4 - core index']
  #allocation1 [shape = 'u32[144,128]{1,0:T(1,128)}', space=vmem, size = 0x12000, scoped, tag = 'internal scratch']
  %s0 = inlined_call_operand.hbm [shape: f32[32,128], index: 0, kind: input, shape index: {}]
  %s1 = inlined_call_operand.hbm [shape: f32[32,128], index: 1, kind: input, shape index: {}]
  %s2 = inlined_call_operand.hbm [shape: f32[16,128], index: 2, kind: input, shape index: {}]
  %s3 = inlined_call_operand.hbm [shape: f32[10,128], index: 3, kind: input, shape index: {}]
  %s4 = inlined_call_operand.hbm [shape: f32[128,128], index: 4, kind: input, shape index: {}]
  %s5 = inlined_call_operand.hbm [shape: f32[128,256], index: 5, kind: input, shape index: {}]
  %s6 = inlined_call_operand.hbm [shape: f32[32,128], index: 6, kind: input, shape index: {}]
  %s7 = inlined_call_operand.hbm [shape: f32[16,128], index: 7, kind: output, shape index: {}]
  %s8 = sld [smem:[#allocation0]]
  $region89: #{tpu_custom_call.1} parent=0
    _
  %s10 = ssub.s32 1, %s8
  %s11 = scalar_select 0, %s10, %s8
  $region1: #{tpu_custom_call.1} parent=0
    #allocation2 [shape = 'u8[16384]{0}', space=vmem, size = 0x4000, scoped, tag = 'input window, operand 0']
    #allocation3 [shape = 's32[2]{0}', space=sflag, size = 0x8, scoped, tag = 'scoped memory for tpu_custom_call.1']
    #allocation4 [shape = 's32[2]{0}', space=sflag, size = 0x8, scoped, tag = 'scoped memory for tpu_custom_call.1']
    #allocation5 [shape = 'u8[16384]{0}', space=vmem, size = 0x4000, scoped, tag = 'input window, operand 1']
    #allocation6 [shape = 's32[2]{0}', space=sflag, size = 0x8, scoped, tag = 'scoped memory for tpu_custom_call.1']
    #allocation7 [shape = 'u8[8192]{0}', space=vmem, size = 0x2000, scoped, tag = 'input window, operand 2']
    #allocation8 [shape = 'u8[8192]{0}', space=vmem, size = 0x2000, scoped, tag = 'input window, operand 3, single buffered']
    #allocation9 [shape = 's32[1]{0}', space=sflag, size = 0x4, scoped, tag = 'scoped memory for tpu_custom_call.1']
    #allocation10 [shape = 'u8[65536]{0}', space=vmem, size = 0x10000, scoped, tag = 'input window, operand 4, single buffered']
    #allocation11 [shape = 'u8[131072]{0}', space=vmem, size = 0x20000, scoped, tag = 'input window, operand 5, single buffered']
    #allocation12 [shape = 's32[1]{0}', space=sflag, size = 0x4, scoped, tag = 'scoped memory for tpu_custom_call.1']
    #allocation13 [shape = 'u8[16384]{0}', space=vmem, size = 0x4000, scoped, tag = 'input window, operand 6, single buffered']
    #allocation14 [shape = 'u8[8192]{0}', space=vmem, size = 0x2000, scoped, tag = 'output window, operand 0']
    %12 = vsyncpa [#allocation3], 0
    %s13 = scalar_lea.sflag [#allocation3], 1
    %14 = vsyncpa %s13, 0
    %15 = vsyncpa [#allocation6], 0
    %s16 = scalar_lea.sflag [#allocation6], 1
    %17 = vsyncpa %s16, 0
    %18 = vsyncpa [#allocation9], 0
    %19 = vsyncpa [#allocation12], 0
    %20 = vsyncpa [#allocation4], 0
    %s21 = scalar_lea.sflag [#allocation4], 1
    %22 = vsyncpa %s21, 0
    loop: start=0, step=1, limit=4
    $region2: #{tpu_custom_call.1} parent=1 // loop_pre_header
      _
    $region3: #{tpu_custom_call.1} parent=1 // loop_header
      %s24 = sphi 0, %s28
      %p25 = scmp.ge.s32.totalorder %s24, 4
      %s34 = sphi 0, %s36
      %s37 = sphi 0, %s34
      %s38 = sphi 0, %s37
      %s54 = sphi 0, %s38
      %s60 = sphi 0, %s62
      %s63 = sphi 0, %s60
      %s64 = sphi 0, %s63
      %s80 = sphi 0, %s64
      %s86 = sphi 0, %s88
      %s89 = sphi 0, %s86
      %s90 = sphi 0, %s89
      %s106 = sphi 0, %s90
      %s110 = sphi 0, %s110
      %s112 = sphi 0, %s110
      %s113 = sphi 0, %s112
      %s127 = sphi 0, %s113
      %s131 = sphi 0, %s131
      %s133 = sphi 0, %s131
      %s134 = sphi 0, %s133
      %s148 = sphi 0, %s134
      %s152 = sphi 0, %s152
      %s154 = sphi 0, %s152
      %s155 = sphi 0, %s154
      %s169 = sphi 0, %s155
      %s173 = sphi 0, %s173
      %s175 = sphi 0, %s173
      %s176 = sphi 0, %s175
      %s190 = sphi 0, %s176
      %s196 = sphi 0, %s198
      %s199 = sphi 0, %s196
      %s200 = sphi 0, %s199
      %s216 = sphi 0, %s200
    $region4: #{tpu_custom_call.1} parent=1 // loop_header_branch
      %27 = sbr.rel (%p25) target = $region8
    $region5: #{tpu_custom_call.1} parent=1 // loop_body
      %s29 = ssub.s32 %s24, 1
      %s30 = ssub.s32 %s24, 2
      %s31 = sadd.s32 %s24, 1
      %s32 = ssub.s32 %s24, %s31
      %p33 = scmp.eq.s32.totalorder %s32, 0
      %s35 = sadd.s32 %s34, 1
      %s36 = scalar_select %p33, %s34, %s35
      %p39 = pneg %p33
      %p40 = scmp.eq.s32.totalorder %s24, 1
      %p41 = por %p39, %p40
      %p42 = scmp.ne.s32.totalorder %s34, %s37
      %p43 = scmp.eq.s32.totalorder %s24, 0
      %p44 = por %p42, %p43
      %p45 = scmp.ne.s32.totalorder %s34, %s37
      %p46 = scmp.eq.s32.totalorder %s29, 1
      %p47 = por %p45, %p46
      %p48 = scmp.ne.s32.totalorder %s37, %s38
      %p49 = scmp.eq.s32.totalorder %s29, 0
      %p50 = por %p48, %p49
      %p51 = scmp.ne.s32.totalorder %s37, %s38
      %p52 = scmp.eq.s32.totalorder %s30, 1
      %p53 = por %p51, %p52
      %p55 = scmp.ne.s32.totalorder %s38, %s54
      %p56 = scmp.eq.s32.totalorder %s30, 0
      %p57 = por %p55, %p56
      %s58 = ssub.s32 %s24, %s31
      %p59 = scmp.eq.s32.totalorder %s58, 0
      %s61 = sadd.s32 %s60, 1
      %s62 = scalar_select %p59, %s60, %s61
      %p65 = pneg %p59
      %p66 = scmp.eq.s32.totalorder %s24, 1
      %p67 = por %p65, %p66
      %p68 = scmp.ne.s32.totalorder %s60, %s63
      %p69 = scmp.eq.s32.totalorder %s24, 0
      %p70 = por %p68, %p69
      %p71 = scmp.ne.s32.totalorder %s60, %s63
      %p72 = scmp.eq.s32.totalorder %s29, 1
      %p73 = por %p71, %p72
      %p74 = scmp.ne.s32.totalorder %s63, %s64
      %p75 = scmp.eq.s32.totalorder %s29, 0
      %p76 = por %p74, %p75
      %p77 = scmp.ne.s32.totalorder %s63, %s64
      %p78 = scmp.eq.s32.totalorder %s30, 1
      %p79 = por %p77, %p78
      %p81 = scmp.ne.s32.totalorder %s64, %s80
      %p82 = scmp.eq.s32.totalorder %s30, 0
      %p83 = por %p81, %p82
      %s84 = ssub.s32 %s24, %s31
      %p85 = scmp.eq.s32.totalorder %s84, 0
      %s87 = sadd.s32 %s86, 1
      %s88 = scalar_select %p85, %s86, %s87
      %p91 = pneg %p85
      %p92 = scmp.eq.s32.totalorder %s24, 1
      %p93 = por %p91, %p92
      %p94 = scmp.ne.s32.totalorder %s86, %s89
      %p95 = scmp.eq.s32.totalorder %s24, 0
      %p96 = por %p94, %p95
      %p97 = scmp.ne.s32.totalorder %s86, %s89
      %p98 = scmp.eq.s32.totalorder %s29, 1
      %p99 = por %p97, %p98
      %p100 = scmp.ne.s32.totalorder %s89, %s90
      %p101 = scmp.eq.s32.totalorder %s29, 0
      %p102 = por %p100, %p101
      %p103 = scmp.ne.s32.totalorder %s89, %s90
      %p104 = scmp.eq.s32.totalorder %s30, 1
      %p105 = por %p103, %p104
      %p107 = scmp.ne.s32.totalorder %s90, %s106
      %p108 = scmp.eq.s32.totalorder %s30, 0
      %p109 = por %p107, %p108
      %s111 = sadd.s32 %s110, 1
      %p114 = scmp.eq.s32.totalorder %s24, 1
      %p115 = scmp.ne.s32.totalorder %s110, %s112
      %p116 = scmp.eq.s32.totalorder %s24, 0
      %p117 = por %p115, %p116
      %p118 = scmp.ne.s32.totalorder %s110, %s112
      %p119 = scmp.eq.s32.totalorder %s29, 1
      %p120 = por %p118, %p119
      %p121 = scmp.ne.s32.totalorder %s112, %s113
      %p122 = scmp.eq.s32.totalorder %s29, 0
      %p123 = por %p121, %p122
      %p124 = scmp.ne.s32.totalorder %s112, %s113
      %p125 = scmp.eq.s32.totalorder %s30, 1
      %p126 = por %p124, %p125
      %p128 = scmp.ne.s32.totalorder %s113, %s127
      %p129 = scmp.eq.s32.totalorder %s30, 0
      %p130 = por %p128, %p129
      %s132 = sadd.s32 %s131, 1
      %p135 = scmp.eq.s32.totalorder %s24, 1
      %p136 = scmp.ne.s32.totalorder %s131, %s133
      %p137 = scmp.eq.s32.totalorder %s24, 0
      %p138 = por %p136, %p137
      %p139 = scmp.ne.s32.totalorder %s131, %s133
      %p140 = scmp.eq.s32.totalorder %s29, 1
      %p141 = por %p139, %p140
      %p142 = scmp.ne.s32.totalorder %s133, %s134
      %p143 = scmp.eq.s32.totalorder %s29, 0
      %p144 = por %p142, %p143
      %p145 = scmp.ne.s32.totalorder %s133, %s134
      %p146 = scmp.eq.s32.totalorder %s30, 1
      %p147 = por %p145, %p146
      %p149 = scmp.ne.s32.totalorder %s134, %s148
      %p150 = scmp.eq.s32.totalorder %s30, 0
      %p151 = por %p149, %p150
      %s153 = sadd.s32 %s152, 1
      %p156 = scmp.eq.s32.totalorder %s24, 1
      %p157 = scmp.ne.s32.totalorder %s152, %s154
      %p158 = scmp.eq.s32.totalorder %s24, 0
      %p159 = por %p157, %p158
      %p160 = scmp.ne.s32.totalorder %s152, %s154
      %p161 = scmp.eq.s32.totalorder %s29, 1
      %p162 = por %p160, %p161
      %p163 = scmp.ne.s32.totalorder %s154, %s155
      %p164 = scmp.eq.s32.totalorder %s29, 0
      %p165 = por %p163, %p164
      %p166 = scmp.ne.s32.totalorder %s154, %s155
      %p167 = scmp.eq.s32.totalorder %s30, 1
      %p168 = por %p166, %p167
      %p170 = scmp.ne.s32.totalorder %s155, %s169
      %p171 = scmp.eq.s32.totalorder %s30, 0
      %p172 = por %p170, %p171
      %s174 = sadd.s32 %s173, 1
      %p177 = scmp.eq.s32.totalorder %s24, 1
      %p178 = scmp.ne.s32.totalorder %s173, %s175
      %p179 = scmp.eq.s32.totalorder %s24, 0
      %p180 = por %p178, %p179
      %p181 = scmp.ne.s32.totalorder %s173, %s175
      %p182 = scmp.eq.s32.totalorder %s29, 1
      %p183 = por %p181, %p182
      %p184 = scmp.ne.s32.totalorder %s175, %s176
      %p185 = scmp.eq.s32.totalorder %s29, 0
      %p186 = por %p184, %p185
      %p187 = scmp.ne.s32.totalorder %s175, %s176
      %p188 = scmp.eq.s32.totalorder %s30, 1
      %p189 = por %p187, %p188
      %p191 = scmp.ne.s32.totalorder %s176, %s190
      %p192 = scmp.eq.s32.totalorder %s30, 0
      %p193 = por %p191, %p192
      %s194 = ssub.s32 %s24, %s31
      %p195 = scmp.eq.s32.totalorder %s194, 0
      %s197 = sadd.s32 %s196, 1
      %s198 = scalar_select %p195, %s196, %s197
      %p201 = pneg %p195
      %p202 = scmp.eq.s32.totalorder %s24, 1
      %p203 = por %p201, %p202
      %p204 = scmp.ne.s32.totalorder %s196, %s199
      %p205 = scmp.eq.s32.totalorder %s24, 0
      %p206 = por %p204, %p205
      %p207 = scmp.ne.s32.totalorder %s196, %s199
      %p208 = scmp.eq.s32.totalorder %s29, 1
      %p209 = por %p207, %p208
      %p210 = scmp.ne.s32.totalorder %s199, %s200
      %p211 = scmp.eq.s32.totalorder %s29, 0
      %p212 = por %p210, %p211
      %p213 = scmp.ne.s32.totalorder %s199, %s200
      %p214 = scmp.eq.s32.totalorder %s30, 1
      %p215 = por %p213, %p214
      %p217 = scmp.ne.s32.totalorder %s200, %s216
      %p218 = scmp.eq.s32.totalorder %s30, 0
      %p219 = por %p217, %p218
      %p220 = scmp.le.s32.totalorder 1, %s24
      %p221 = scmp.lt.s32.totalorder %s24, 3
      %p222 = pnand %p220, %p221
      %p223 = pneg %p222
      // Predicated region
      $region9: #{tpu_custom_call.1} parent=5 // pred_check
        _
      $region10: #{tpu_custom_call.1} parent=5 // pred_check_branch
        %225 = sbr.rel (%p222) target = $region12
      $region11: #{tpu_custom_call.1} parent=5 // pred_region
        %s226 = ssub.s32 %s24, 1
        // Predicated region
        $region13: #{tpu_custom_call.1} parent=11 // pred_check
          %p227 = pneg %p123
        $region14: #{tpu_custom_call.1} parent=11 // pred_check_branch
          %229 = sbr.rel (%p227) target = $region16
        $region15: #{tpu_custom_call.1} parent=11 // pred_region
          %s231 = ssub.s32 256, 256
          %232 = vsyncadd [#allocation9], %s231
          %s233 = sshll.u32 [#allocation8], 4
          %s234 = int_to_ptr.vmem [resolvable:$true] %s233
          %239 = dma.hbm_to_vmem [thread:$0]  %s3, 256, %s234, [#allocation9], 128, 128, 8
        $region16: #{tpu_custom_call.1} parent=11 // pred_fallthru
          _
        // Predicated region
        $region17: #{tpu_custom_call.1} parent=11 // pred_check
          %p240 = pneg %p144
        $region18: #{tpu_custom_call.1} parent=11 // pred_check_branch
          %242 = sbr.rel (%p240) target = $region20
        $region19: #{tpu_custom_call.1} parent=11 // pred_region
          %s244 = ssub.s32 2048, 2048
          %245 = vsyncadd [#allocation9], %s244
          %s246 = sshll.u32 [#allocation10], 4
          %s247 = int_to_ptr.vmem [resolvable:$true] %s246
          %252 = dma.hbm_to_vmem [thread:$0]  %s4, 2048, %s247, [#allocation9], 128, 128, 8
        $region20: #{tpu_custom_call.1} parent=11 // pred_fallthru
          _
        // Predicated region
        $region21: #{tpu_custom_call.1} parent=11 // pred_check
          %p253 = pneg %p165
        $region22: #{tpu_custom_call.1} parent=11 // pred_check_branch
          %255 = sbr.rel (%p253) target = $region24
        $region23: #{tpu_custom_call.1} parent=11 // pred_region
          %s257 = ssub.s32 4096, 4096
          %258 = vsyncadd [#allocation12], %s257
          %s259 = sshll.u32 [#allocation11], 4
          %s260 = int_to_ptr.vmem [resolvable:$true] %s259
          %265 = dma.hbm_to_vmem [thread:$0]  %s5, 4096, %s260, [#allocation12], 256, 256, 16
        $region24: #{tpu_custom_call.1} parent=11 // pred_fallthru
          _
        // Predicated region
        $region25: #{tpu_custom_call.1} parent=11 // pred_check
          %p266 = pneg %p186
        $region26: #{tpu_custom_call.1} parent=11 // pred_check_branch
          %268 = sbr.rel (%p266) target = $region28
        $region27: #{tpu_custom_call.1} parent=11 // pred_region
          %s270 = ssub.s32 512, 512
          %271 = vsyncadd [#allocation12], %s270
          %s272 = sshll.u32 [#allocation13], 4
          %s273 = int_to_ptr.vmem [resolvable:$true] %s272
          %278 = dma.hbm_to_vmem [thread:$0]  %s6, 512, %s273, [#allocation12], 128, 128, 8
        $region28: #{tpu_custom_call.1} parent=11 // pred_fallthru
          _
      $region12: #{tpu_custom_call.1} parent=5 // pred_fallthru
        _
      %p279 = scmp.lt.s32.totalorder %s24, 2
      // Predicated region
      $region29: #{tpu_custom_call.1} parent=5 // pred_check
        %p280 = pneg %p279
      $region30: #{tpu_custom_call.1} parent=5 // pred_check_branch
        %282 = sbr.rel (%p280) target = $region32
      $region31: #{tpu_custom_call.1} parent=5 // pred_region
        // Predicated region
        $region33: #{tpu_custom_call.1} parent=31 // pred_check
          %p283 = pneg %p44
        $region34: #{tpu_custom_call.1} parent=31 // pred_check_branch
          %285 = sbr.rel (%p283) target = $region36
        $region35: #{tpu_custom_call.1} parent=31 // pred_region
          %s286 = sand.u32 %s34, 1
          %s287 = scalar_lea.sflag [#allocation3], %s286
          %s288 = sand.u32 %s34, 1
          %s289 = smul.addr %s288, 16
          %s290 = scalar_lea.vmem [#allocation2], %s289
          %s291 = smul.u32 2, %s24
          %s293 = ssub.s32 256, 256
          %294 = vsyncadd %s287, %s293
          %s295 = smul.addr %s291, 128
          %s296 = scalar_lea.hbm %s0, %s295
          %s297 = sshll.u32 %s290, 4
          %s298 = int_to_ptr.vmem [resolvable:$true] %s297
          %303 = dma.hbm_to_vmem [thread:$0]  %s296, 256, %s298, %s287, 128, 128, 8
        $region36: #{tpu_custom_call.1} parent=31 // pred_fallthru
          _
        // Predicated region
        $region37: #{tpu_custom_call.1} parent=31 // pred_check
          %p304 = pneg %p70
        $region38: #{tpu_custom_call.1} parent=31 // pred_check_branch
          %306 = sbr.rel (%p304) target = $region40
        $region39: #{tpu_custom_call.1} parent=31 // pred_region
          %s307 = sand.u32 %s24, 1
          %s308 = scalar_lea.sflag [#allocation6], %s307
          %s309 = sand.u32 %s60, 1
          %s310 = smul.addr %s309, 16
          %s311 = scalar_lea.vmem [#allocation5], %s310
          %s312 = smul.u32 2, %s24
          %s314 = ssub.s32 256, 256
          %315 = vsyncadd %s308, %s314
          %s316 = smul.addr %s312, 128
          %s317 = scalar_lea.hbm %s1, %s316
          %s318 = sshll.u32 %s311, 4
          %s319 = int_to_ptr.vmem [resolvable:$true] %s318
          %324 = dma.hbm_to_vmem [thread:$0]  %s317, 256, %s319, %s308, 128, 128, 8
        $region40: #{tpu_custom_call.1} parent=31 // pred_fallthru
          _
        // Predicated region
        $region41: #{tpu_custom_call.1} parent=31 // pred_check
          %p325 = pneg %p96
        $region42: #{tpu_custom_call.1} parent=31 // pred_check_branch
          %327 = sbr.rel (%p325) target = $region44
        $region43: #{tpu_custom_call.1} parent=31 // pred_region
          %s328 = sand.u32 %s24, 1
          %s329 = scalar_lea.sflag [#allocation6], %s328
          %s330 = sand.u32 %s86, 1
          %s331 = smul.addr %s330, 8
          %s332 = scalar_lea.vmem [#allocation7], %s331
          %s334 = ssub.s32 128, 128
          %335 = vsyncadd %s329, %s334
          %s336 = smul.addr %s24, 128
          %s337 = scalar_lea.hbm %s2, %s336
          %s339 = sshll.u32 %s332, 4
          %s340 = int_to_ptr.vmem [resolvable:$true] %s339
          %342 = dma.hbm_to_vmem [thread:$0]  %s337, 128, %s340, %s329
        $region44: #{tpu_custom_call.1} parent=31 // pred_fallthru
          _
      $region32: #{tpu_custom_call.1} parent=5 // pred_fallthru
        _
      %p343 = scmp.le.s32.totalorder 1, %s24
      %p344 = scmp.lt.s32.totalorder %s24, 3
      %p345 = pnand %p343, %p344
      %p346 = pneg %p345
      // Predicated region
      $region45: #{tpu_custom_call.1} parent=5 // pred_check
        _
      $region46: #{tpu_custom_call.1} parent=5 // pred_check_branch
        %348 = sbr.rel (%p345) target = $region48
      $region47: #{tpu_custom_call.1} parent=5 // pred_region
        %s349 = ssub.s32 %s24, 1
        %s350 = sand.u32 %s37, 1
        %s351 = scalar_lea.sflag [#allocation3], %s350
        %s352 = sand.u32 %s37, 1
        %s353 = smul.addr %s352, 16
        %s354 = scalar_lea.vmem [#allocation2], %s353
        // Predicated region
        $region49: #{tpu_custom_call.1} parent=47 // pred_check
          %p355 = pneg %p50
        $region50: #{tpu_custom_call.1} parent=47 // pred_check_branch
          %357 = sbr.rel (%p355) target = $region52
        $region51: #{tpu_custom_call.1} parent=47 // pred_region
          %358 = dma.done %s351, 256
        $region52: #{tpu_custom_call.1} parent=47 // pred_fallthru
          _
        %s359 = sand.u32 %s29, 1
        %s360 = scalar_lea.sflag [#allocation6], %s359
        %s361 = sand.u32 %s63, 1
        %s362 = smul.addr %s361, 16
        %s363 = scalar_lea.vmem [#allocation5], %s362
        // Predicated region
        $region53: #{tpu_custom_call.1} parent=47 // pred_check
          %p364 = pneg %p76
        $region54: #{tpu_custom_call.1} parent=47 // pred_check_branch
          %366 = sbr.rel (%p364) target = $region56
        $region55: #{tpu_custom_call.1} parent=47 // pred_region
          %367 = dma.done %s360, 256
        $region56: #{tpu_custom_call.1} parent=47 // pred_fallthru
          _
        %s368 = sand.u32 %s29, 1
        %s369 = scalar_lea.sflag [#allocation6], %s368
        %s370 = sand.u32 %s89, 1
        %s371 = smul.addr %s370, 8
        %s372 = scalar_lea.vmem [#allocation7], %s371
        // Predicated region
        $region57: #{tpu_custom_call.1} parent=47 // pred_check
          %p373 = pneg %p102
        $region58: #{tpu_custom_call.1} parent=47 // pred_check_branch
          %375 = sbr.rel (%p373) target = $region60
        $region59: #{tpu_custom_call.1} parent=47 // pred_region
          %376 = dma.done %s369, 128
        $region60: #{tpu_custom_call.1} parent=47 // pred_fallthru
          _
        // Predicated region
        $region61: #{tpu_custom_call.1} parent=47 // pred_check
          %p377 = pneg %p123
        $region62: #{tpu_custom_call.1} parent=47 // pred_check_branch
          %379 = sbr.rel (%p377) target = $region64
        $region63: #{tpu_custom_call.1} parent=47 // pred_region
          %380 = dma.done [#allocation9], 256
        $region64: #{tpu_custom_call.1} parent=47 // pred_fallthru
          _
        // Predicated region
        $region65: #{tpu_custom_call.1} parent=47 // pred_check
          %p381 = pneg %p144
        $region66: #{tpu_custom_call.1} parent=47 // pred_check_branch
          %383 = sbr.rel (%p381) target = $region68
        $region67: #{tpu_custom_call.1} parent=47 // pred_region
          %384 = dma.done [#allocation9], 2048
        $region68: #{tpu_custom_call.1} parent=47 // pred_fallthru
          _
        // Predicated region
        $region69: #{tpu_custom_call.1} parent=47 // pred_check
          %p385 = pneg %p165
        $region70: #{tpu_custom_call.1} parent=47 // pred_check_branch
          %387 = sbr.rel (%p385) target = $region72
        $region71: #{tpu_custom_call.1} parent=47 // pred_region
          %388 = dma.done [#allocation12], 4096
        $region72: #{tpu_custom_call.1} parent=47 // pred_fallthru
          _
        // Predicated region
        $region73: #{tpu_custom_call.1} parent=47 // pred_check
          %p389 = pneg %p186
        $region74: #{tpu_custom_call.1} parent=47 // pred_check_branch
          %391 = sbr.rel (%p389) target = $region76
        $region75: #{tpu_custom_call.1} parent=47 // pred_region
          %392 = dma.done [#allocation12], 512
        $region76: #{tpu_custom_call.1} parent=47 // pred_fallthru
          _
        %s393 = sand.u32 %s37, 1
        %s394 = scalar_lea.sflag [#allocation3], %s393
        %s395 = sand.u32 %s37, 1
        %s396 = smul.addr %s395, 16
        %s397 = scalar_lea.vmem [#allocation2], %s396
        %p398 = pneg %p50
        %p399 = pneg %p47
        %s400 = sand.u32 %s29, 1
        %s401 = scalar_lea.sflag [#allocation6], %s400
        %s402 = sand.u32 %s63, 1
        %s403 = smul.addr %s402, 16
        %s404 = scalar_lea.vmem [#allocation5], %s403
        %p405 = pneg %p76
        %p406 = pneg %p73
        %s407 = sand.u32 %s29, 1
        %s408 = scalar_lea.sflag [#allocation6], %s407
        %s409 = sand.u32 %s89, 1
        %s410 = smul.addr %s409, 8
        %s411 = scalar_lea.vmem [#allocation7], %s410
        %p412 = pneg %p102
        %p413 = pneg %p99
        %p414 = pneg %p123
        %p415 = pneg %p120
        %p416 = pneg %p144
        %p417 = pneg %p141
        %p418 = pneg %p165
        %p419 = pneg %p162
        %p420 = pneg %p186
        %p421 = pneg %p183
        %p422 = pneg %p212
        %p423 = pneg %p209
        %s424 = sand.u32 %s199, 1
        %s425 = scalar_lea.sflag [#allocation4], %s424
        %s426 = sand.u32 %s199, 1
        %s427 = smul.addr %s426, 8
        %s428 = scalar_lea.vmem [#allocation14], %s427
        %s429 = smul.u32 2, %s29
        %s430 = smul.u32 2, %s29
        %v431 = vld [vmem:[#allocation8] sm:$0xff]
        %v432 = vld [vmem:[#allocation8 + $0x8] sm:$0x3]
        %v433 = vld [vmem:[%s354] sm:$0xff]
        %v434 = vld [vmem:[%s354 + $0x8] sm:$0xff]
        %v435 = vld [vmem:[%s363] sm:$0xff]
        %v436 = vld [vmem:[%s363 + $0x8] sm:$0xff]
        %v437 = vadd.f32 %v433, %v435
        %v438 = vadd.f32 %v434, %v436
        %439 = vadd.xlane.f32.xlu0 %v437
        %v440 = vpop.xlane.xlu0 %439
        %441 = vadd.xlane.f32.xlu0 %v438
        %v442 = vpop.xlane.xlu0 %441
        %v443 = vmul.f32 %v440, 0.041666668
        %v444 = vmul.f32 %v442, 0.041666668
        %v445 = vsub.f32 %v437, %v443
        %v446 = vsub.f32 %v438, %v444
        %v447 = vlaneseq
        %v448 = vand.u32 %v447, 127
        %vm449 = vcmp.lt.s32.totalorder %v448, 24
        %v450 = vsel %vm449, %v445, 0.0
        %v451 = vsel %vm449, %v446, 0.0
        %v452 = vmul.f32 %v450, %v450
        %v453 = vmul.f32 %v451, %v451
        %454 = vadd.xlane.f32.xlu0 %v452
        %v455 = vpop.xlane.xlu0 %454
        %456 = vadd.xlane.f32.xlu0 %v453
        %v457 = vpop.xlane.xlu0 %456
        %v458 = vmul.f32 %v455, 0.041666668
        %v459 = vmul.f32 %v457, 0.041666668
        %v460 = vadd.f32 %v458, 1e-05
        %v461 = vadd.f32 %v459, 1e-05
        %v462 = vrsqrt.pop %v460
        %v463 = vrsqrt.pop %v461
        %v464 = vmul.f32 %v450, %v462
        %v465 = vmul.f32 %v451, %v463
        %v466 = vlaneseq
        %v467 = vshrl.u32 %v466, 7
        %v468 = vsub.s32 0, %v467
        %v469 = vrot.slane %v431, %v468
        %v470 = vmul.f32 %v464, %v469
        %v471 = vmul.f32 %v465, %v469
        %v472 = vlaneseq
        %v473 = vshrl.u32 %v472, 7
        %v474 = vsub.s32 1, %v473
        %v475 = vrot.slane %v431, %v474
        %v476 = vadd.f32 %v470, %v475
        %v477 = vadd.f32 %v471, %v475
        %v478 = vld [vmem:[%s372] sm:$0xff]
        %479 = vadd.xlane.f32.xlu0 %v478
        %v480 = vpop.xlane.xlu0 %479
        %v481 = vmul.f32 %v480, 0.03125
        %v482 = vsub.f32 %v478, %v481
        %vm483 = vcmp.lt.s32.totalorder %v448, 32
        %v484 = vsel %vm483, %v482, 0.0
        %v485 = vmul.f32 %v484, %v484
        %486 = vadd.xlane.f32.xlu0 %v485
        %v487 = vpop.xlane.xlu0 %486
        %v488 = vmul.f32 %v487, 0.03125
        %v489 = vadd.f32 %v488, 1e-05
        %v490 = vrsqrt.pop %v489
        %v491 = vmul.f32 %v484, %v490
        %v492 = vlaneseq
        %v493 = vshrl.u32 %v492, 7
        %v494 = vsub.s32 2, %v493
        %v495 = vrot.slane %v431, %v494
        %v496 = vmul.f32 %v491, %v495
        %v497 = vlaneseq
        %v498 = vshrl.u32 %v497, 7
        %v499 = vsub.s32 3, %v498
        %v500 = vrot.slane %v431, %v499
        %v501 = vadd.f32 %v496, %v500
        %v502 = vld [vmem:[#allocation10] sm:$0xff]
        %v503 = vld [vmem:[#allocation10 + $0x8] sm:$0xff]
        %v504 = vld [vmem:[#allocation10 + $0x10] sm:$0xff]
        %v505 = vld [vmem:[#allocation10 + $0x18] sm:$0xff]
        %v506 = vld [vmem:[#allocation10 + $0x20] sm:$0xff]
        %v507 = vld [vmem:[#allocation10 + $0x28] sm:$0xff]
        %v508 = vld [vmem:[#allocation10 + $0x30] sm:$0xff]
        %v509 = vld [vmem:[#allocation10 + $0x38] sm:$0xff]
        %v510 = vld [vmem:[#allocation10 + $0x40] sm:$0xff]
        %v511 = vld [vmem:[#allocation10 + $0x48] sm:$0xff]
        %v512 = vld [vmem:[#allocation10 + $0x50] sm:$0xff]
        %v513 = vld [vmem:[#allocation10 + $0x58] sm:$0xff]
        %v514 = vld [vmem:[#allocation10 + $0x60] sm:$0xff]
        %v515 = vld [vmem:[#allocation10 + $0x68] sm:$0xff]
        %v516 = vld [vmem:[#allocation10 + $0x70] sm:$0xff]
        %v517 = vld [vmem:[#allocation10 + $0x78] sm:$0xff]
        %v518 = vlaneseq
        %v519 = vshrl.u32 %v518, 7
        %v520 = vsub.s32 6, %v519
        %v521 = vrot.slane %v431, %v520
        %522 = vmatprep.subr.mxu0 0.0
        %523 = vmatpush1.msra.mxu0 %v517
        %524 = vmatprep.subr.mxu0 0.0
        %525 = vmatpush1.msra.mxu0 %v516
        %526 = vmatprep.subr.mxu0 0.0
        %527 = vmatpush1.msra.mxu0 %v515
        %528 = vmatprep.subr.mxu0 0.0
        %529 = vmatpush1.msra.mxu0 %v514
        %530 = vmatprep.subr.mxu0 0.0
        %531 = vmatpush1.msra.mxu0 %v513
        %532 = vmatprep.subr.mxu0 0.0
        %533 = vmatpush1.msra.mxu0 %v512
        %534 = vmatprep.subr.mxu0 0.0
        %535 = vmatpush1.msra.mxu0 %v511
        %536 = vmatprep.subr.mxu0 0.0
        %537 = vmatpush1.msra.mxu0 %v510
        %538 = vmatprep.subr.mxu0 0.0
        %539 = vmatpush1.msra.mxu0 %v509
        %540 = vmatprep.subr.mxu0 0.0
        %541 = vmatpush1.msra.mxu0 %v508
        %542 = vmatprep.subr.mxu0 0.0
        %543 = vmatpush1.msra.mxu0 %v507
        %544 = vmatprep.subr.mxu0 0.0
        %545 = vmatpush1.msra.mxu0 %v506
        %546 = vmatprep.subr.mxu0 0.0
        %547 = vmatpush1.msra.mxu0 %v505
        %548 = vmatprep.subr.mxu0 0.0
        %549 = vmatpush1.msra.mxu0 %v504
        %550 = vmatprep.subr.mxu0 0.0
        %551 = vmatpush1.msra.mxu0 %v503
        %552 = vmatprep.subr.mxu0 0.0
        %553 = vmatpush1.msra.mxu0 %v502
        %554 = vmatprep.subr.mxu0 0.0
        %555 = vmatpush2.msra.mxu0 0.0
        %556 = vmatprep.subr.mxu0 0.0
        %557 = vmatpush2.msra.mxu0 0.0
        %558 = vmatprep.subr.mxu0 0.0
        %559 = vmatpush2.msra.mxu0 0.0
        %560 = vmatprep.subr.mxu0 0.0
        %561 = vmatpush2.msra.mxu0 0.0
        %562 = vmatprep.subr.mxu0 0.0
        %563 = vmatpush2.msra.mxu0 0.0
        %564 = vmatprep.subr.mxu0 0.0
        %565 = vmatpush2.msra.mxu0 0.0
        %566 = vmatprep.subr.mxu0 0.0
        %567 = vmatpush2.msra.mxu0 0.0
        %568 = vmatprep.subr.mxu0 0.0
        %569 = vmatpush2.msra.mxu0 0.0
        %570 = vmatprep.subr.mxu0 0.0
        %571 = vmatpush2.msra.mxu0 0.0
        %572 = vmatprep.subr.mxu0 0.0
        %573 = vmatpush2.msra.mxu0 0.0
        %574 = vmatprep.subr.mxu0 0.0
        %575 = vmatpush2.msra.mxu0 0.0
        %576 = vmatprep.subr.mxu0 0.0
        %577 = vmatpush2.msra.mxu0 0.0
        %578 = vmatprep.subr.mxu0 0.0
        %579 = vmatpush2.msra.mxu0 0.0
        %580 = vmatprep.subr.mxu0 0.0
        %581 = vmatpush2.msra.mxu0 0.0
        %582 = vmatprep.subr.mxu0 0.0
        %583 = vmatpush2.msra.mxu0 0.0
        %584 = vmatprep.subr.mxu0 0.0
        %585 = vmatpush2.msra.mxu0 0.0
        %586 = vmatprep.mubr.f32.mxu0 0.0
        %587 = vmatmul.mubr.f32.gmra.mxu0 %v501
        %v588 = vpop.f32.mrf.mxu0
        %v589 = vadd.f32 %v521, %v588
        %v590 = vpop.f32.mrf.mxu0
        %591 = vdwg.mxu0
        %v592 = vld [vmem:[#allocation11] sm:$0xff]
        %v593 = vld [vmem:[#allocation11 + $0x8] sm:$0xff]
        %v594 = vld [vmem:[#allocation11 + $0x10] sm:$0xff]
        %v595 = vld [vmem:[#allocation11 + $0x18] sm:$0xff]
        %v596 = vld [vmem:[#allocation11 + $0x20] sm:$0xff]
        %v597 = vld [vmem:[#allocation11 + $0x28] sm:$0xff]
        %v598 = vld [vmem:[#allocation11 + $0x30] sm:$0xff]
        %v599 = vld [vmem:[#allocation11 + $0x38] sm:$0xff]
        %v600 = vld [vmem:[#allocation11 + $0x40] sm:$0xff]
        %v601 = vld [vmem:[#allocation11 + $0x48] sm:$0xff]
        %v602 = vld [vmem:[#allocation11 + $0x50] sm:$0xff]
        %v603 = vld [vmem:[#allocation11 + $0x58] sm:$0xff]
        %v604 = vld [vmem:[#allocation11 + $0x60] sm:$0xff]
        %v605 = vld [vmem:[#allocation11 + $0x68] sm:$0xff]
        %v606 = vld [vmem:[#allocation11 + $0x70] sm:$0xff]
        %v607 = vld [vmem:[#allocation11 + $0x78] sm:$0xff]
        %v608 = vld [vmem:[#allocation11 + $0x80] sm:$0xff]
        %v609 = vld [vmem:[#allocation11 + $0x88] sm:$0xff]
        %v610 = vld [vmem:[#allocation11 + $0x90] sm:$0xff]
        %v611 = vld [vmem:[#allocation11 + $0x98] sm:$0xff]
        %v612 = vld [vmem:[#allocation11 + $0xa0] sm:$0xff]
        %v613 = vld [vmem:[#allocation11 + $0xa8] sm:$0xff]
        %v614 = vld [vmem:[#allocation11 + $0xb0] sm:$0xff]
        %v615 = vld [vmem:[#allocation11 + $0xb8] sm:$0xff]
        %v616 = vld [vmem:[#allocation11 + $0xc0] sm:$0xff]
        %v617 = vld [vmem:[#allocation11 + $0xc8] sm:$0xff]
        %v618 = vld [vmem:[#allocation11 + $0xd0] sm:$0xff]
        %v619 = vld [vmem:[#allocation11 + $0xd8] sm:$0xff]
        %v620 = vld [vmem:[#allocation11 + $0xe0] sm:$0xff]
        %v621 = vld [vmem:[#allocation11 + $0xe8] sm:$0xff]
        %v622 = vld [vmem:[#allocation11 + $0xf0] sm:$0xff]
        %v623 = vld [vmem:[#allocation11 + $0xf8] sm:$0xff]
        %624 = vmatprep.subr.mxu0 %v623
        %625 = vmatpush1.msra.mxu0 %v622
        %626 = vmatprep.subr.mxu0 %v621
        %627 = vmatpush1.msra.mxu0 %v620
        %628 = vmatprep.subr.mxu0 %v619
        %629 = vmatpush1.msra.mxu0 %v618
        %630 = vmatprep.subr.mxu0 %v617
        %631 = vmatpush1.msra.mxu0 %v616
        %632 = vmatprep.subr.mxu0 %v615
        %633 = vmatpush1.msra.mxu0 %v614
        %634 = vmatprep.subr.mxu0 %v613
        %635 = vmatpush1.msra.mxu0 %v612
        %636 = vmatprep.subr.mxu0 %v611
        %637 = vmatpush1.msra.mxu0 %v610
        %638 = vmatprep.subr.mxu0 %v609
        %639 = vmatpush1.msra.mxu0 %v608
        %640 = vmatprep.subr.mxu0 %v607
        %641 = vmatpush1.msra.mxu0 %v606
        %642 = vmatprep.subr.mxu0 %v605
        %643 = vmatpush1.msra.mxu0 %v604
        %644 = vmatprep.subr.mxu0 %v603
        %645 = vmatpush1.msra.mxu0 %v602
        %646 = vmatprep.subr.mxu0 %v601
        %647 = vmatpush1.msra.mxu0 %v600
        %648 = vmatprep.subr.mxu0 %v599
        %649 = vmatpush1.msra.mxu0 %v598
        %650 = vmatprep.subr.mxu0 %v597
        %651 = vmatpush1.msra.mxu0 %v596
        %652 = vmatprep.subr.mxu0 %v595
        %653 = vmatpush1.msra.mxu0 %v594
        %654 = vmatprep.subr.mxu0 %v593
        %655 = vmatpush1.msra.mxu0 %v592
        %656 = vmatprep.subr.mxu0 0.0
        %657 = vmatpush2.msra.mxu0 0.0
        %658 = vmatprep.subr.mxu0 0.0
        %659 = vmatpush2.msra.mxu0 0.0
        %660 = vmatprep.subr.mxu0 0.0
        %661 = vmatpush2.msra.mxu0 0.0
        %662 = vmatprep.subr.mxu0 0.0
        %663 = vmatpush2.msra.mxu0 0.0
        %664 = vmatprep.subr.mxu0 0.0
        %665 = vmatpush2.msra.mxu0 0.0
        %666 = vmatprep.subr.mxu0 0.0
        %667 = vmatpush2.msra.mxu0 0.0
        %668 = vmatprep.subr.mxu0 0.0
        %669 = vmatpush2.msra.mxu0 0.0
        %670 = vmatprep.subr.mxu0 0.0
        %671 = vmatpush2.msra.mxu0 0.0
        %672 = vmatprep.subr.mxu0 0.0
        %673 = vmatpush2.msra.mxu0 0.0
        %674 = vmatprep.subr.mxu0 0.0
        %675 = vmatpush2.msra.mxu0 0.0
        %676 = vmatprep.subr.mxu0 0.0
        %677 = vmatpush2.msra.mxu0 0.0
        %678 = vmatprep.subr.mxu0 0.0
        %679 = vmatpush2.msra.mxu0 0.0
        %680 = vmatprep.subr.mxu0 0.0
        %681 = vmatpush2.msra.mxu0 0.0
        %682 = vmatprep.subr.mxu0 0.0
        %683 = vmatpush2.msra.mxu0 0.0
        %684 = vmatprep.subr.mxu0 0.0
        %685 = vmatpush2.msra.mxu0 0.0
        %686 = vmatprep.subr.mxu0 0.0
        %687 = vmatpush2.msra.mxu0 0.0
        %688 = vmatprep.mubr.f32.mxu0 0.0
        %689 = vmatmul.mubr.f32.gmra.mxu0 %v476
        %v690 = vpop.f32.mrf.mxu0
        %v691 = vadd.f32 0.0, %v690
        %v692 = vpop.f32.mrf.mxu0
        %v693 = vadd.f32 0.0, %v692
        %694 = vmatprep.mubr.f32.mxu0 0.0
        %695 = vmatmul.mubr.f32.gmra.mxu0 %v477
        %v696 = vpop.f32.mrf.mxu0
        %v697 = vadd.f32 0.0, %v696
        %v698 = vpop.f32.mrf.mxu0
        %v699 = vadd.f32 0.0, %v698
        %700 = vdwg.mxu0
        %v701 = vlaneseq
        %v702 = vshrl.u32 %v701, 7
        %v703 = vsub.s32 7, %v702
        %v704 = vrot.slane %v431, %v703
        %v705 = vadd.f32 %v691, %v704
        %v706 = vadd.f32 %v697, %v704
        %v707 = vlaneseq
        %v708 = vshrl.u32 %v707, 7
        %v709 = vsub.s32 0, %v708
        %v710 = vrot.slane %v432, %v709
        %v711 = vadd.f32 %v693, %v710
        %v712 = vadd.f32 %v699, %v710
        %v714 = vcombine.high %v589, %v589
        %vm715 = vcmask 64512
        %v716 = vsel %vm715, %v589, 0
        %v719 = vsel %vm715, %v705, 0
        %721 = vmatprep.subr.mxu0 0.0
        %722 = vmatpush1.xpose.msra.mxu0 0.0
        %723 = vmatprep.subr.mxu0 0.0
        %724 = vmatpush1.xpose.msra.mxu0 0.0
        %725 = vmatprep.subr.mxu0 0.0
        %726 = vmatpush1.xpose.msra.mxu0 0.0
        %727 = vmatprep.subr.mxu0 0.0
        %728 = vmatpush1.xpose.msra.mxu0 0.0
        %729 = vmatprep.subr.mxu0 0.0
        %730 = vmatpush1.xpose.msra.mxu0 0.0
        %731 = vmatprep.subr.mxu0 0.0
        %732 = vmatpush1.xpose.msra.mxu0 0.0
        %733 = vmatprep.subr.mxu0 0.0
        %734 = vmatpush1.xpose.msra.mxu0 0.0
        %735 = vmatprep.subr.mxu0 0.0
        %736 = vmatpush1.xpose.msra.mxu0 0.0
        %737 = vmatprep.subr.mxu0 0.0
        %738 = vmatpush1.xpose.msra.mxu0 0.0
        %739 = vmatprep.subr.mxu0 0.0
        %740 = vmatpush1.xpose.msra.mxu0 0.0
        %741 = vmatprep.subr.mxu0 0.0
        %742 = vmatpush1.xpose.msra.mxu0 0.0
        %743 = vmatprep.subr.mxu0 0.0
        %744 = vmatpush1.xpose.msra.mxu0 0.0
        %745 = vmatprep.subr.mxu0 0.0
        %746 = vmatpush1.xpose.msra.mxu0 0.0
        %747 = vmatprep.subr.mxu0 0.0
        %748 = vmatpush1.xpose.msra.mxu0 0.0
        %749 = vmatprep.subr.mxu0 0.0
        %750 = vmatpush1.xpose.msra.mxu0 0.0
        %751 = vmatprep.subr.mxu0 0.0
        %752 = vmatpush1.xpose.msra.mxu0 %v719
        %753 = vmatprep.subr.mxu0 0.0
        %754 = vmatpush2.xpose.msra.mxu0 0.0
        %755 = vmatprep.subr.mxu0 0.0
        %756 = vmatpush2.xpose.msra.mxu0 0.0
        %757 = vmatprep.subr.mxu0 0.0
        %758 = vmatpush2.xpose.msra.mxu0 0.0
        %759 = vmatprep.subr.mxu0 0.0
        %760 = vmatpush2.xpose.msra.mxu0 0.0
        %761 = vmatprep.subr.mxu0 0.0
        %762 = vmatpush2.xpose.msra.mxu0 0.0
        %763 = vmatprep.subr.mxu0 0.0
        %764 = vmatpush2.xpose.msra.mxu0 0.0
        %765 = vmatprep.subr.mxu0 0.0
        %766 = vmatpush2.xpose.msra.mxu0 0.0
        %767 = vmatprep.subr.mxu0 0.0
        %768 = vmatpush2.xpose.msra.mxu0 0.0
        %769 = vmatprep.subr.mxu0 0.0
        %770 = vmatpush2.xpose.msra.mxu0 0.0
        %771 = vmatprep.subr.mxu0 0.0
        %772 = vmatpush2.xpose.msra.mxu0 0.0
        %773 = vmatprep.subr.mxu0 0.0
        %774 = vmatpush2.xpose.msra.mxu0 0.0
        %775 = vmatprep.subr.mxu0 0.0
        %776 = vmatpush2.xpose.msra.mxu0 0.0
        %777 = vmatprep.subr.mxu0 0.0
        %778 = vmatpush2.xpose.msra.mxu0 0.0
        %779 = vmatprep.subr.mxu0 0.0
        %780 = vmatpush2.xpose.msra.mxu0 0.0
        %781 = vmatprep.subr.mxu0 0.0
        %782 = vmatpush2.xpose.msra.mxu0 0.0
        %783 = vmatprep.subr.mxu0 0.0
        %784 = vmatpush2.xpose.msra.mxu0 0.0
        %785 = vmatprep.mubr.f32.mxu0 0.0
        %786 = vmatmul.mubr.f32.gmra.mxu0 %v716
        %v787 = vpop.f32.mrf.mxu0
        %v788 = vadd.f32 0.0, %v787
        %v789 = vpop.f32.mrf.mxu0
        %790 = vdwg.mxu0
        %v791 = vsel %vm715, %v714, 0
        %v794 = vsel %vm715, %v706, 0
        %796 = vmatprep.subr.mxu0 0.0
        %797 = vmatpush1.xpose.msra.mxu0 0.0
        %798 = vmatprep.subr.mxu0 0.0
        %799 = vmatpush1.xpose.msra.mxu0 0.0
        %800 = vmatprep.subr.mxu0 0.0
        %801 = vmatpush1.xpose.msra.mxu0 0.0
        %802 = vmatprep.subr.mxu0 0.0
        %803 = vmatpush1.xpose.msra.mxu0 0.0
        %804 = vmatprep.subr.mxu0 0.0
        %805 = vmatpush1.xpose.msra.mxu0 0.0
        %806 = vmatprep.subr.mxu0 0.0
        %807 = vmatpush1.xpose.msra.mxu0 0.0
        %808 = vmatprep.subr.mxu0 0.0
        %809 = vmatpush1.xpose.msra.mxu0 0.0
        %810 = vmatprep.subr.mxu0 0.0
        %811 = vmatpush1.xpose.msra.mxu0 0.0
        %812 = vmatprep.subr.mxu0 0.0
        %813 = vmatpush1.xpose.msra.mxu0 0.0
        %814 = vmatprep.subr.mxu0 0.0
        %815 = vmatpush1.xpose.msra.mxu0 0.0
        %816 = vmatprep.subr.mxu0 0.0
        %817 = vmatpush1.xpose.msra.mxu0 0.0
        %818 = vmatprep.subr.mxu0 0.0
        %819 = vmatpush1.xpose.msra.mxu0 0.0
        %820 = vmatprep.subr.mxu0 0.0
        %821 = vmatpush1.xpose.msra.mxu0 0.0
        %822 = vmatprep.subr.mxu0 0.0
        %823 = vmatpush1.xpose.msra.mxu0 0.0
        %824 = vmatprep.subr.mxu0 0.0
        %825 = vmatpush1.xpose.msra.mxu0 0.0
        %826 = vmatprep.subr.mxu0 0.0
        %827 = vmatpush1.xpose.msra.mxu0 %v794
        %828 = vmatprep.subr.mxu0 0.0
        %829 = vmatpush2.xpose.msra.mxu0 0.0
        %830 = vmatprep.subr.mxu0 0.0
        %831 = vmatpush2.xpose.msra.mxu0 0.0
        %832 = vmatprep.subr.mxu0 0.0
        %833 = vmatpush2.xpose.msra.mxu0 0.0
        %834 = vmatprep.subr.mxu0 0.0
        %835 = vmatpush2.xpose.msra.mxu0 0.0
        %836 = vmatprep.subr.mxu0 0.0
        %837 = vmatpush2.xpose.msra.mxu0 0.0
        %838 = vmatprep.subr.mxu0 0.0
        %839 = vmatpush2.xpose.msra.mxu0 0.0
        %840 = vmatprep.subr.mxu0 0.0
        %841 = vmatpush2.xpose.msra.mxu0 0.0
        %842 = vmatprep.subr.mxu0 0.0
        %843 = vmatpush2.xpose.msra.mxu0 0.0
        %844 = vmatprep.subr.mxu0 0.0
        %845 = vmatpush2.xpose.msra.mxu0 0.0
        %846 = vmatprep.subr.mxu0 0.0
        %847 = vmatpush2.xpose.msra.mxu0 0.0
        %848 = vmatprep.subr.mxu0 0.0
        %849 = vmatpush2.xpose.msra.mxu0 0.0
        %850 = vmatprep.subr.mxu0 0.0
        %851 = vmatpush2.xpose.msra.mxu0 0.0
        %852 = vmatprep.subr.mxu0 0.0
        %853 = vmatpush2.xpose.msra.mxu0 0.0
        %854 = vmatprep.subr.mxu0 0.0
        %855 = vmatpush2.xpose.msra.mxu0 0.0
        %856 = vmatprep.subr.mxu0 0.0
        %857 = vmatpush2.xpose.msra.mxu0 0.0
        %858 = vmatprep.subr.mxu0 0.0
        %859 = vmatpush2.xpose.msra.mxu0 0.0
        %860 = vmatprep.mubr.f32.mxu0 0.0
        %861 = vmatmul.mubr.f32.gmra.mxu0 %v791
        %v862 = vpop.f32.mrf.mxu0
        %v863 = vadd.f32 0.0, %v862
        %v864 = vpop.f32.mrf.mxu0
        %865 = vdwg.mxu0
        %vm866 = vcmask 60416
        %v867 = vsel %vm866, %v788, -inf
        %868 = vmax.xlane.f32.xlu0 %v867
        %v869 = vpop.xlane.xlu0 %868
        %v870 = vsel %vm866, %v863, -inf
        %871 = vmax.xlane.f32.xlu0 %v870
        %v872 = vpop.xlane.xlu0 %871
        %v873 = vsub.f32 %v788, %v869
        %v874 = vsub.f32 %v863, %v872
        %v875 = vmul.f32 %v873, 1.442695
        %v876 = vpow.pop %v875
        %v877 = vmul.f32 %v874, 1.442695
        %v878 = vpow.pop %v877
        %v879 = vsel %vm866, %v876, 0.0
        %880 = vadd.xlane.f32.xlu0 %v879
        %v881 = vpop.xlane.xlu0 %880
        %v882 = vsel %vm866, %v878, 0.0
        %883 = vadd.xlane.f32.xlu0 %v882
        %v884 = vpop.xlane.xlu0 %883
        %v885 = vrcp.pop %v881
        %v886 = vrcp.pop %v884
        %v887 = vmul.f32 %v876, %v885
        %v888 = vmul.f32 %v878, %v886
        %v890 = vsel %vm715, %v887, 0
        %892 = vmatprep.subr.mxu0 0.0
        %893 = vmatpush1.msra.mxu0 0.0
        %894 = vmatprep.subr.mxu0 0.0
        %895 = vmatpush1.msra.mxu0 0.0
        %896 = vmatprep.subr.mxu0 0.0
        %897 = vmatpush1.msra.mxu0 0.0
        %898 = vmatprep.subr.mxu0 0.0
        %899 = vmatpush1.msra.mxu0 0.0
        %900 = vmatprep.subr.mxu0 0.0
        %901 = vmatpush1.msra.mxu0 0.0
        %902 = vmatprep.subr.mxu0 0.0
        %903 = vmatpush1.msra.mxu0 0.0
        %904 = vmatprep.subr.mxu0 0.0
        %905 = vmatpush1.msra.mxu0 0.0
        %906 = vmatprep.subr.mxu0 0.0
        %907 = vmatpush1.msra.mxu0 0.0
        %908 = vmatprep.subr.mxu0 0.0
        %909 = vmatpush1.msra.mxu0 0.0
        %910 = vmatprep.subr.mxu0 0.0
        %911 = vmatpush1.msra.mxu0 0.0
        %912 = vmatprep.subr.mxu0 0.0
        %913 = vmatpush1.msra.mxu0 0.0
        %914 = vmatprep.subr.mxu0 0.0
        %915 = vmatpush1.msra.mxu0 0.0
        %916 = vmatprep.subr.mxu0 0.0
        %917 = vmatpush1.msra.mxu0 0.0
        %918 = vmatprep.subr.mxu0 0.0
        %919 = vmatpush1.msra.mxu0 0.0
        %920 = vmatprep.subr.mxu0 0.0
        %921 = vmatpush1.msra.mxu0 0.0
        %922 = vmatprep.subr.mxu0 0.0
        %923 = vmatpush1.msra.mxu0 %v711
        %924 = vmatprep.subr.mxu0 0.0
        %925 = vmatpush2.msra.mxu0 0.0
        %926 = vmatprep.subr.mxu0 0.0
        %927 = vmatpush2.msra.mxu0 0.0
        %928 = vmatprep.subr.mxu0 0.0
        %929 = vmatpush2.msra.mxu0 0.0
        %930 = vmatprep.subr.mxu0 0.0
        %931 = vmatpush2.msra.mxu0 0.0
        %932 = vmatprep.subr.mxu0 0.0
        %933 = vmatpush2.msra.mxu0 0.0
        %934 = vmatprep.subr.mxu0 0.0
        %935 = vmatpush2.msra.mxu0 0.0
        %936 = vmatprep.subr.mxu0 0.0
        %937 = vmatpush2.msra.mxu0 0.0
        %938 = vmatprep.subr.mxu0 0.0
        %939 = vmatpush2.msra.mxu0 0.0
        %940 = vmatprep.subr.mxu0 0.0
        %941 = vmatpush2.msra.mxu0 0.0
        %942 = vmatprep.subr.mxu0 0.0
        %943 = vmatpush2.msra.mxu0 0.0
        %944 = vmatprep.subr.mxu0 0.0
        %945 = vmatpush2.msra.mxu0 0.0
        %946 = vmatprep.subr.mxu0 0.0
        %947 = vmatpush2.msra.mxu0 0.0
        %948 = vmatprep.subr.mxu0 0.0
        %949 = vmatpush2.msra.mxu0 0.0
        %950 = vmatprep.subr.mxu0 0.0
        %951 = vmatpush2.msra.mxu0 0.0
        %952 = vmatprep.subr.mxu0 0.0
        %953 = vmatpush2.msra.mxu0 0.0
        %954 = vmatprep.subr.mxu0 0.0
        %955 = vmatpush2.msra.mxu0 0.0
        %956 = vmatprep.mubr.f32.mxu0 0.0
        %957 = vmatmul.mubr.f32.gmra.mxu0 %v890
        %v958 = vpop.f32.mrf.mxu0
        %v959 = vadd.f32 0.0, %v958
        %v960 = vpop.f32.mrf.mxu0
        %961 = vdwg.mxu0
        %v963 = vsel %vm715, %v888, 0
        %965 = vmatprep.subr.mxu0 0.0
        %966 = vmatpush1.msra.mxu0 0.0
        %967 = vmatprep.subr.mxu0 0.0
        %968 = vmatpush1.msra.mxu0 0.0
        %969 = vmatprep.subr.mxu0 0.0
        %970 = vmatpush1.msra.mxu0 0.0
        %971 = vmatprep.subr.mxu0 0.0
        %972 = vmatpush1.msra.mxu0 0.0
        %973 = vmatprep.subr.mxu0 0.0
        %974 = vmatpush1.msra.mxu0 0.0
        %975 = vmatprep.subr.mxu0 0.0
        %976 = vmatpush1.msra.mxu0 0.0
        %977 = vmatprep.subr.mxu0 0.0
        %978 = vmatpush1.msra.mxu0 0.0
        %979 = vmatprep.subr.mxu0 0.0
        %980 = vmatpush1.msra.mxu0 0.0
        %981 = vmatprep.subr.mxu0 0.0
        %982 = vmatpush1.msra.mxu0 0.0
        %983 = vmatprep.subr.mxu0 0.0
        %984 = vmatpush1.msra.mxu0 0.0
        %985 = vmatprep.subr.mxu0 0.0
        %986 = vmatpush1.msra.mxu0 0.0
        %987 = vmatprep.subr.mxu0 0.0
        %988 = vmatpush1.msra.mxu0 0.0
        %989 = vmatprep.subr.mxu0 0.0
        %990 = vmatpush1.msra.mxu0 0.0
        %991 = vmatprep.subr.mxu0 0.0
        %992 = vmatpush1.msra.mxu0 0.0
        %993 = vmatprep.subr.mxu0 0.0
        %994 = vmatpush1.msra.mxu0 0.0
        %995 = vmatprep.subr.mxu0 0.0
        %996 = vmatpush1.msra.mxu0 %v712
        %997 = vmatprep.subr.mxu0 0.0
        %998 = vmatpush2.msra.mxu0 0.0
        %999 = vmatprep.subr.mxu0 0.0
        %1000 = vmatpush2.msra.mxu0 0.0
        %1001 = vmatprep.subr.mxu0 0.0
        %1002 = vmatpush2.msra.mxu0 0.0
        %1003 = vmatprep.subr.mxu0 0.0
        %1004 = vmatpush2.msra.mxu0 0.0
        %1005 = vmatprep.subr.mxu0 0.0
        %1006 = vmatpush2.msra.mxu0 0.0
        %1007 = vmatprep.subr.mxu0 0.0
        %1008 = vmatpush2.msra.mxu0 0.0
        %1009 = vmatprep.subr.mxu0 0.0
        %1010 = vmatpush2.msra.mxu0 0.0
        %1011 = vmatprep.subr.mxu0 0.0
        %1012 = vmatpush2.msra.mxu0 0.0
        %1013 = vmatprep.subr.mxu0 0.0
        %1014 = vmatpush2.msra.mxu0 0.0
        %1015 = vmatprep.subr.mxu0 0.0
        %1016 = vmatpush2.msra.mxu0 0.0
        %1017 = vmatprep.subr.mxu0 0.0
        %1018 = vmatpush2.msra.mxu0 0.0
        %1019 = vmatprep.subr.mxu0 0.0
        %1020 = vmatpush2.msra.mxu0 0.0
        %1021 = vmatprep.subr.mxu0 0.0
        %1022 = vmatpush2.msra.mxu0 0.0
        %1023 = vmatprep.subr.mxu0 0.0
        %1024 = vmatpush2.msra.mxu0 0.0
        %1025 = vmatprep.subr.mxu0 0.0
        %1026 = vmatpush2.msra.mxu0 0.0
        %1027 = vmatprep.subr.mxu0 0.0
        %1028 = vmatpush2.msra.mxu0 0.0
        %1029 = vmatprep.mubr.f32.mxu0 0.0
        %1030 = vmatmul.mubr.f32.gmra.mxu0 %v963
        %v1031 = vpop.f32.mrf.mxu0
        %v1032 = vadd.f32 0.0, %v1031
        %v1033 = vpop.f32.mrf.mxu0
        %1034 = vdwg.mxu0
        %v1035 = vld [vmem:[#allocation13] sm:$0xff]
        %1036 = vrot.lane.b32.xlu0 %v589, 120
        %v1037 = vpop.permute.xlu0 %1036
        %1038 = vrot.lane.b32.xlu0 %v705, 120
        %v1039 = vpop.permute.xlu0 %1038
        %v1040 = vsel %vm715, %v1037, 0
        %v1042 = vsel %vm715, %v1039, 0
        %1044 = vmatprep.subr.mxu0 0.0
        %1045 = vmatpush1.xpose.msra.mxu0 0.0
        %1046 = vmatprep.subr.mxu0 0.0
        %1047 = vmatpush1.xpose.msra.mxu0 0.0
        %1048 = vmatprep.subr.mxu0 0.0
        %1049 = vmatpush1.xpose.msra.mxu0 0.0
        %1050 = vmatprep.subr.mxu0 0.0
        %1051 = vmatpush1.xpose.msra.mxu0 0.0
        %1052 = vmatprep.subr.mxu0 0.0
        %1053 = vmatpush1.xpose.msra.mxu0 0.0
        %1054 = vmatprep.subr.mxu0 0.0
        %1055 = vmatpush1.xpose.msra.mxu0 0.0
        %1056 = vmatprep.subr.mxu0 0.0
        %1057 = vmatpush1.xpose.msra.mxu0 0.0
        %1058 = vmatprep.subr.mxu0 0.0
        %1059 = vmatpush1.xpose.msra.mxu0 0.0
        %1060 = vmatprep.subr.mxu0 0.0
        %1061 = vmatpush1.xpose.msra.mxu0 0.0
        %1062 = vmatprep.subr.mxu0 0.0
        %1063 = vmatpush1.xpose.msra.mxu0 0.0
        %1064 = vmatprep.subr.mxu0 0.0
        %1065 = vmatpush1.xpose.msra.mxu0 0.0
        %1066 = vmatprep.subr.mxu0 0.0
        %1067 = vmatpush1.xpose.msra.mxu0 0.0
        %1068 = vmatprep.subr.mxu0 0.0
        %1069 = vmatpush1.xpose.msra.mxu0 0.0
        %1070 = vmatprep.subr.mxu0 0.0
        %1071 = vmatpush1.xpose.msra.mxu0 0.0
        %1072 = vmatprep.subr.mxu0 0.0
        %1073 = vmatpush1.xpose.msra.mxu0 0.0
        %1074 = vmatprep.subr.mxu0 0.0
        %1075 = vmatpush1.xpose.msra.mxu0 %v1042
        %1076 = vmatprep.subr.mxu0 0.0
        %1077 = vmatpush2.xpose.msra.mxu0 0.0
        %1078 = vmatprep.subr.mxu0 0.0
        %1079 = vmatpush2.xpose.msra.mxu0 0.0
        %1080 = vmatprep.subr.mxu0 0.0
        %1081 = vmatpush2.xpose.msra.mxu0 0.0
        %1082 = vmatprep.subr.mxu0 0.0
        %1083 = vmatpush2.xpose.msra.mxu0 0.0
        %1084 = vmatprep.subr.mxu0 0.0
        %1085 = vmatpush2.xpose.msra.mxu0 0.0
        %1086 = vmatprep.subr.mxu0 0.0
        %1087 = vmatpush2.xpose.msra.mxu0 0.0
        %1088 = vmatprep.subr.mxu0 0.0
        %1089 = vmatpush2.xpose.msra.mxu0 0.0
        %1090 = vmatprep.subr.mxu0 0.0
        %1091 = vmatpush2.xpose.msra.mxu0 0.0
        %1092 = vmatprep.subr.mxu0 0.0
        %1093 = vmatpush2.xpose.msra.mxu0 0.0
        %1094 = vmatprep.subr.mxu0 0.0
        %1095 = vmatpush2.xpose.msra.mxu0 0.0
        %1096 = vmatprep.subr.mxu0 0.0
        %1097 = vmatpush2.xpose.msra.mxu0 0.0
        %1098 = vmatprep.subr.mxu0 0.0
        %1099 = vmatpush2.xpose.msra.mxu0 0.0
        %1100 = vmatprep.subr.mxu0 0.0
        %1101 = vmatpush2.xpose.msra.mxu0 0.0
        %1102 = vmatprep.subr.mxu0 0.0
        %1103 = vmatpush2.xpose.msra.mxu0 0.0
        %1104 = vmatprep.subr.mxu0 0.0
        %1105 = vmatpush2.xpose.msra.mxu0 0.0
        %1106 = vmatprep.subr.mxu0 0.0
        %1107 = vmatpush2.xpose.msra.mxu0 0.0
        %1108 = vmatprep.mubr.f32.mxu0 0.0
        %1109 = vmatmul.mubr.f32.gmra.mxu0 %v1040
        %v1110 = vpop.f32.mrf.mxu0
        %v1111 = vadd.f32 0.0, %v1110
        %v1112 = vpop.f32.mrf.mxu0
        %1113 = vdwg.mxu0
        %1114 = vrot.lane.b32.xlu0 %v714, 120
        %v1115 = vpop.permute.xlu0 %1114
        %1116 = vrot.lane.b32.xlu0 %v706, 120
        %v1117 = vpop.permute.xlu0 %1116
        %v1118 = vsel %vm715, %v1115, 0
        %v1120 = vsel %vm715, %v1117, 0
        %1122 = vmatprep.subr.mxu0 0.0
        %1123 = vmatpush1.xpose.msra.mxu0 0.0
        %1124 = vmatprep.subr.mxu0 0.0
        %1125 = vmatpush1.xpose.msra.mxu0 0.0
        %1126 = vmatprep.subr.mxu0 0.0
        %1127 = vmatpush1.xpose.msra.mxu0 0.0
        %1128 = vmatprep.subr.mxu0 0.0
        %1129 = vmatpush1.xpose.msra.mxu0 0.0
        %1130 = vmatprep.subr.mxu0 0.0
        %1131 = vmatpush1.xpose.msra.mxu0 0.0
        %1132 = vmatprep.subr.mxu0 0.0
        %1133 = vmatpush1.xpose.msra.mxu0 0.0
        %1134 = vmatprep.subr.mxu0 0.0
        %1135 = vmatpush1.xpose.msra.mxu0 0.0
        %1136 = vmatprep.subr.mxu0 0.0
        %1137 = vmatpush1.xpose.msra.mxu0 0.0
        %1138 = vmatprep.subr.mxu0 0.0
        %1139 = vmatpush1.xpose.msra.mxu0 0.0
        %1140 = vmatprep.subr.mxu0 0.0
        %1141 = vmatpush1.xpose.msra.mxu0 0.0
        %1142 = vmatprep.subr.mxu0 0.0
        %1143 = vmatpush1.xpose.msra.mxu0 0.0
        %1144 = vmatprep.subr.mxu0 0.0
        %1145 = vmatpush1.xpose.msra.mxu0 0.0
        %1146 = vmatprep.subr.mxu0 0.0
        %1147 = vmatpush1.xpose.msra.mxu0 0.0
        %1148 = vmatprep.subr.mxu0 0.0
        %1149 = vmatpush1.xpose.msra.mxu0 0.0
        %1150 = vmatprep.subr.mxu0 0.0
        %1151 = vmatpush1.xpose.msra.mxu0 0.0
        %1152 = vmatprep.subr.mxu0 0.0
        %1153 = vmatpush1.xpose.msra.mxu0 %v1120
        %1154 = vmatprep.subr.mxu0 0.0
        %1155 = vmatpush2.xpose.msra.mxu0 0.0
        %1156 = vmatprep.subr.mxu0 0.0
        %1157 = vmatpush2.xpose.msra.mxu0 0.0
        %1158 = vmatprep.subr.mxu0 0.0
        %1159 = vmatpush2.xpose.msra.mxu0 0.0
        %1160 = vmatprep.subr.mxu0 0.0
        %1161 = vmatpush2.xpose.msra.mxu0 0.0
        %1162 = vmatprep.subr.mxu0 0.0
        %1163 = vmatpush2.xpose.msra.mxu0 0.0
        %1164 = vmatprep.subr.mxu0 0.0
        %1165 = vmatpush2.xpose.msra.mxu0 0.0
        %1166 = vmatprep.subr.mxu0 0.0
        %1167 = vmatpush2.xpose.msra.mxu0 0.0
        %1168 = vmatprep.subr.mxu0 0.0
        %1169 = vmatpush2.xpose.msra.mxu0 0.0
        %1170 = vmatprep.subr.mxu0 0.0
        %1171 = vmatpush2.xpose.msra.mxu0 0.0
        %1172 = vmatprep.subr.mxu0 0.0
        %1173 = vmatpush2.xpose.msra.mxu0 0.0
        %1174 = vmatprep.subr.mxu0 0.0
        %1175 = vmatpush2.xpose.msra.mxu0 0.0
        %1176 = vmatprep.subr.mxu0 0.0
        %1177 = vmatpush2.xpose.msra.mxu0 0.0
        %1178 = vmatprep.subr.mxu0 0.0
        %1179 = vmatpush2.xpose.msra.mxu0 0.0
        %1180 = vmatprep.subr.mxu0 0.0
        %1181 = vmatpush2.xpose.msra.mxu0 0.0
        %1182 = vmatprep.subr.mxu0 0.0
        %1183 = vmatpush2.xpose.msra.mxu0 0.0
        %1184 = vmatprep.subr.mxu0 0.0
        %1185 = vmatpush2.xpose.msra.mxu0 0.0
        %1186 = vmatprep.mubr.f32.mxu0 0.0
        %1187 = vmatmul.mubr.f32.gmra.mxu0 %v1118
        %v1188 = vpop.f32.mrf.mxu0
        %v1189 = vadd.f32 0.0, %v1188
        %v1190 = vpop.f32.mrf.mxu0
        %1191 = vdwg.mxu0
        %v1192 = vsel %vm866, %v1111, -inf
        %1193 = vmax.xlane.f32.xlu0 %v1192
        %v1194 = vpop.xlane.xlu0 %1193
        %v1195 = vsel %vm866, %v1189, -inf
        %1196 = vmax.xlane.f32.xlu0 %v1195
        %v1197 = vpop.xlane.xlu0 %1196
        %v1198 = vsub.f32 %v1111, %v1194
        %v1199 = vsub.f32 %v1189, %v1197
        %v1200 = vmul.f32 %v1198, 1.442695
        %v1201 = vpow.pop %v1200
        %v1202 = vmul.f32 %v1199, 1.442695
        %v1203 = vpow.pop %v1202
        %v1204 = vsel %vm866, %v1201, 0.0
        %1205 = vadd.xlane.f32.xlu0 %v1204
        %v1206 = vpop.xlane.xlu0 %1205
        %v1207 = vsel %vm866, %v1203, 0.0
        %1208 = vadd.xlane.f32.xlu0 %v1207
        %v1209 = vpop.xlane.xlu0 %1208
        %v1210 = vrcp.pop %v1206
        %v1211 = vrcp.pop %v1209
        %v1212 = vmul.f32 %v1201, %v1210
        %v1213 = vmul.f32 %v1203, %v1211
        %1215 = vrot.lane.b32.xlu0 %v711, 120
        %v1216 = vpop.permute.xlu0 %1215
        %v1219 = vsel %vm715, %v1212, 0
        %1221 = vmatprep.subr.mxu0 0.0
        %1222 = vmatpush1.msra.mxu0 0.0
        %1223 = vmatprep.subr.mxu0 0.0
        %1224 = vmatpush1.msra.mxu0 0.0
        %1225 = vmatprep.subr.mxu0 0.0
        %1226 = vmatpush1.msra.mxu0 0.0
        %1227 = vmatprep.subr.mxu0 0.0
        %1228 = vmatpush1.msra.mxu0 0.0
        %1229 = vmatprep.subr.mxu0 0.0
        %1230 = vmatpush1.msra.mxu0 0.0
        %1231 = vmatprep.subr.mxu0 0.0
        %1232 = vmatpush1.msra.mxu0 0.0
        %1233 = vmatprep.subr.mxu0 0.0
        %1234 = vmatpush1.msra.mxu0 0.0
        %1235 = vmatprep.subr.mxu0 0.0
        %1236 = vmatpush1.msra.mxu0 0.0
        %1237 = vmatprep.subr.mxu0 0.0
        %1238 = vmatpush1.msra.mxu0 0.0
        %1239 = vmatprep.subr.mxu0 0.0
        %1240 = vmatpush1.msra.mxu0 0.0
        %1241 = vmatprep.subr.mxu0 0.0
        %1242 = vmatpush1.msra.mxu0 0.0
        %1243 = vmatprep.subr.mxu0 0.0
        %1244 = vmatpush1.msra.mxu0 0.0
        %1245 = vmatprep.subr.mxu0 0.0
        %1246 = vmatpush1.msra.mxu0 0.0
        %1247 = vmatprep.subr.mxu0 0.0
        %1248 = vmatpush1.msra.mxu0 0.0
        %1249 = vmatprep.subr.mxu0 0.0
        %1250 = vmatpush1.msra.mxu0 0.0
        %1251 = vmatprep.subr.mxu0 0.0
        %1252 = vmatpush1.msra.mxu0 %v1216
        %1253 = vmatprep.subr.mxu0 0.0
        %1254 = vmatpush2.msra.mxu0 0.0
        %1255 = vmatprep.subr.mxu0 0.0
        %1256 = vmatpush2.msra.mxu0 0.0
        %1257 = vmatprep.subr.mxu0 0.0
        %1258 = vmatpush2.msra.mxu0 0.0
        %1259 = vmatprep.subr.mxu0 0.0
        %1260 = vmatpush2.msra.mxu0 0.0
        %1261 = vmatprep.subr.mxu0 0.0
        %1262 = vmatpush2.msra.mxu0 0.0
        %1263 = vmatprep.subr.mxu0 0.0
        %1264 = vmatpush2.msra.mxu0 0.0
        %1265 = vmatprep.subr.mxu0 0.0
        %1266 = vmatpush2.msra.mxu0 0.0
        %1267 = vmatprep.subr.mxu0 0.0
        %1268 = vmatpush2.msra.mxu0 0.0
        %1269 = vmatprep.subr.mxu0 0.0
        %1270 = vmatpush2.msra.mxu0 0.0
        %1271 = vmatprep.subr.mxu0 0.0
        %1272 = vmatpush2.msra.mxu0 0.0
        %1273 = vmatprep.subr.mxu0 0.0
        %1274 = vmatpush2.msra.mxu0 0.0
        %1275 = vmatprep.subr.mxu0 0.0
        %1276 = vmatpush2.msra.mxu0 0.0
        %1277 = vmatprep.subr.mxu0 0.0
        %1278 = vmatpush2.msra.mxu0 0.0
        %1279 = vmatprep.subr.mxu0 0.0
        %1280 = vmatpush2.msra.mxu0 0.0
        %1281 = vmatprep.subr.mxu0 0.0
        %1282 = vmatpush2.msra.mxu0 0.0
        %1283 = vmatprep.subr.mxu0 0.0
        %1284 = vmatpush2.msra.mxu0 0.0
        %1285 = vmatprep.mubr.f32.mxu0 0.0
        %1286 = vmatmul.mubr.f32.gmra.mxu0 %v1219
        %v1287 = vpop.f32.mrf.mxu0
        %v1288 = vadd.f32 0.0, %v1287
        %v1289 = vpop.f32.mrf.mxu0
        %1290 = vdwg.mxu0
        %1292 = vrot.lane.b32.xlu0 %v712, 120
        %v1293 = vpop.permute.xlu0 %1292
        %v1296 = vsel %vm715, %v1213, 0
        %1298 = vmatprep.subr.mxu0 0.0
        %1299 = vmatpush1.msra.mxu0 0.0
        %1300 = vmatprep.subr.mxu0 0.0
        %1301 = vmatpush1.msra.mxu0 0.0
        %1302 = vmatprep.subr.mxu0 0.0
        %1303 = vmatpush1.msra.mxu0 0.0
        %1304 = vmatprep.subr.mxu0 0.0
        %1305 = vmatpush1.msra.mxu0 0.0
        %1306 = vmatprep.subr.mxu0 0.0
        %1307 = vmatpush1.msra.mxu0 0.0
        %1308 = vmatprep.subr.mxu0 0.0
        %1309 = vmatpush1.msra.mxu0 0.0
        %1310 = vmatprep.subr.mxu0 0.0
        %1311 = vmatpush1.msra.mxu0 0.0
        %1312 = vmatprep.subr.mxu0 0.0
        %1313 = vmatpush1.msra.mxu0 0.0
        %1314 = vmatprep.subr.mxu0 0.0
        %1315 = vmatpush1.msra.mxu0 0.0
        %1316 = vmatprep.subr.mxu0 0.0
        %1317 = vmatpush1.msra.mxu0 0.0
        %1318 = vmatprep.subr.mxu0 0.0
        %1319 = vmatpush1.msra.mxu0 0.0
        %1320 = vmatprep.subr.mxu0 0.0
        %1321 = vmatpush1.msra.mxu0 0.0
        %1322 = vmatprep.subr.mxu0 0.0
        %1323 = vmatpush1.msra.mxu0 0.0
        %1324 = vmatprep.subr.mxu0 0.0
        %1325 = vmatpush1.msra.mxu0 0.0
        %1326 = vmatprep.subr.mxu0 0.0
        %1327 = vmatpush1.msra.mxu0 0.0
        %1328 = vmatprep.subr.mxu0 0.0
        %1329 = vmatpush1.msra.mxu0 %v1293
        %1330 = vmatprep.subr.mxu0 0.0
        %1331 = vmatpush2.msra.mxu0 0.0
        %1332 = vmatprep.subr.mxu0 0.0
        %1333 = vmatpush2.msra.mxu0 0.0
        %1334 = vmatprep.subr.mxu0 0.0
        %1335 = vmatpush2.msra.mxu0 0.0
        %1336 = vmatprep.subr.mxu0 0.0
        %1337 = vmatpush2.msra.mxu0 0.0
        %1338 = vmatprep.subr.mxu0 0.0
        %1339 = vmatpush2.msra.mxu0 0.0
        %1340 = vmatprep.subr.mxu0 0.0
        %1341 = vmatpush2.msra.mxu0 0.0
        %1342 = vmatprep.subr.mxu0 0.0
        %1343 = vmatpush2.msra.mxu0 0.0
        %1344 = vmatprep.subr.mxu0 0.0
        %1345 = vmatpush2.msra.mxu0 0.0
        %1346 = vmatprep.subr.mxu0 0.0
        %1347 = vmatpush2.msra.mxu0 0.0
        %1348 = vmatprep.subr.mxu0 0.0
        %1349 = vmatpush2.msra.mxu0 0.0
        %1350 = vmatprep.subr.mxu0 0.0
        %1351 = vmatpush2.msra.mxu0 0.0
        %1352 = vmatprep.subr.mxu0 0.0
        %1353 = vmatpush2.msra.mxu0 0.0
        %1354 = vmatprep.subr.mxu0 0.0
        %1355 = vmatpush2.msra.mxu0 0.0
        %1356 = vmatprep.subr.mxu0 0.0
        %1357 = vmatpush2.msra.mxu0 0.0
        %1358 = vmatprep.subr.mxu0 0.0
        %1359 = vmatpush2.msra.mxu0 0.0
        %1360 = vmatprep.subr.mxu0 0.0
        %1361 = vmatpush2.msra.mxu0 0.0
        %1362 = vmatprep.mubr.f32.mxu0 0.0
        %1363 = vmatmul.mubr.f32.gmra.mxu0 %v1296
        %v1364 = vpop.f32.mrf.mxu0
        %v1365 = vadd.f32 0.0, %v1364
        %v1366 = vpop.f32.mrf.mxu0
        %1367 = vdwg.mxu0
        %v1368 = vld [vmem:[#allocation13 + $0x8] sm:$0xff]
        %v1371 = vcombine.low %v1288, %v1365
        %v1372 = vsel %vm715, %v1371, 0
        %1374 = vmatprep.subr.mxu0 0.0
        %1375 = vmatpush1.msra.mxu0 0.0
        %1376 = vmatprep.subr.mxu0 0.0
        %1377 = vmatpush1.msra.mxu0 0.0
        %1378 = vmatprep.subr.mxu0 0.0
        %1379 = vmatpush1.msra.mxu0 0.0
        %1380 = vmatprep.subr.mxu0 0.0
        %1381 = vmatpush1.msra.mxu0 0.0
        %1382 = vmatprep.subr.mxu0 0.0
        %1383 = vmatpush1.msra.mxu0 0.0
        %1384 = vmatprep.subr.mxu0 0.0
        %1385 = vmatpush1.msra.mxu0 0.0
        %1386 = vmatprep.subr.mxu0 0.0
        %1387 = vmatpush1.msra.mxu0 0.0
        %1388 = vmatprep.subr.mxu0 0.0
        %1389 = vmatpush1.msra.mxu0 0.0
        %1390 = vmatprep.subr.mxu0 0.0
        %1391 = vmatpush1.msra.mxu0 0.0
        %1392 = vmatprep.subr.mxu0 0.0
        %1393 = vmatpush1.msra.mxu0 0.0
        %1394 = vmatprep.subr.mxu0 0.0
        %1395 = vmatpush1.msra.mxu0 0.0
        %1396 = vmatprep.subr.mxu0 0.0
        %1397 = vmatpush1.msra.mxu0 0.0
        %1398 = vmatprep.subr.mxu0 0.0
        %1399 = vmatpush1.msra.mxu0 0.0
        %1400 = vmatprep.subr.mxu0 0.0
        %1401 = vmatpush1.msra.mxu0 0.0
        %1402 = vmatprep.subr.mxu0 0.0
        %1403 = vmatpush1.msra.mxu0 0.0
        %1404 = vmatprep.subr.mxu0 0.0
        %1405 = vmatpush1.msra.mxu0 %v1368
        %1406 = vmatprep.subr.mxu0 0.0
        %1407 = vmatpush2.msra.mxu0 0.0
        %1408 = vmatprep.subr.mxu0 0.0
        %1409 = vmatpush2.msra.mxu0 0.0
        %1410 = vmatprep.subr.mxu0 0.0
        %1411 = vmatpush2.msra.mxu0 0.0
        %1412 = vmatprep.subr.mxu0 0.0
        %1413 = vmatpush2.msra.mxu0 0.0
        %1414 = vmatprep.subr.mxu0 0.0
        %1415 = vmatpush2.msra.mxu0 0.0
        %1416 = vmatprep.subr.mxu0 0.0
        %1417 = vmatpush2.msra.mxu0 0.0
        %1418 = vmatprep.subr.mxu0 0.0
        %1419 = vmatpush2.msra.mxu0 0.0
        %1420 = vmatprep.subr.mxu0 0.0
        %1421 = vmatpush2.msra.mxu0 0.0
        %1422 = vmatprep.subr.mxu0 0.0
        %1423 = vmatpush2.msra.mxu0 0.0
        %1424 = vmatprep.subr.mxu0 0.0
        %1425 = vmatpush2.msra.mxu0 0.0
        %1426 = vmatprep.subr.mxu0 0.0
        %1427 = vmatpush2.msra.mxu0 0.0
        %1428 = vmatprep.subr.mxu0 0.0
        %1429 = vmatpush2.msra.mxu0 0.0
        %1430 = vmatprep.subr.mxu0 0.0
        %1431 = vmatpush2.msra.mxu0 0.0
        %1432 = vmatprep.subr.mxu0 0.0
        %1433 = vmatpush2.msra.mxu0 0.0
        %1434 = vmatprep.subr.mxu0 0.0
        %1435 = vmatpush2.msra.mxu0 0.0
        %1436 = vmatprep.subr.mxu0 0.0
        %1437 = vmatpush2.msra.mxu0 0.0
        %1438 = vmatprep.mubr.f32.mxu0 0.0
        %1439 = vmatmul.mubr.f32.gmra.mxu0 %v1372
        %v1440 = vpop.f32.mrf.mxu0
        %v1441 = vadd.f32 0.0, %v1440
        %v1442 = vpop.f32.mrf.mxu0
        %1443 = vdwg.mxu0
        %v1446 = vcombine.low %v959, %v1032
        %v1447 = vsel %vm715, %v1446, 0
        %1449 = vmatprep.subr.mxu0 0.0
        %1450 = vmatpush1.msra.mxu0 0.0
        %1451 = vmatprep.subr.mxu0 0.0
        %1452 = vmatpush1.msra.mxu0 0.0
        %1453 = vmatprep.subr.mxu0 0.0
        %1454 = vmatpush1.msra.mxu0 0.0
        %1455 = vmatprep.subr.mxu0 0.0
        %1456 = vmatpush1.msra.mxu0 0.0
        %1457 = vmatprep.subr.mxu0 0.0
        %1458 = vmatpush1.msra.mxu0 0.0
        %1459 = vmatprep.subr.mxu0 0.0
        %1460 = vmatpush1.msra.mxu0 0.0
        %1461 = vmatprep.subr.mxu0 0.0
        %1462 = vmatpush1.msra.mxu0 0.0
        %1463 = vmatprep.subr.mxu0 0.0
        %1464 = vmatpush1.msra.mxu0 0.0
        %1465 = vmatprep.subr.mxu0 0.0
        %1466 = vmatpush1.msra.mxu0 0.0
        %1467 = vmatprep.subr.mxu0 0.0
        %1468 = vmatpush1.msra.mxu0 0.0
        %1469 = vmatprep.subr.mxu0 0.0
        %1470 = vmatpush1.msra.mxu0 0.0
        %1471 = vmatprep.subr.mxu0 0.0
        %1472 = vmatpush1.msra.mxu0 0.0
        %1473 = vmatprep.subr.mxu0 0.0
        %1474 = vmatpush1.msra.mxu0 0.0
        %1475 = vmatprep.subr.mxu0 0.0
        %1476 = vmatpush1.msra.mxu0 0.0
        %1477 = vmatprep.subr.mxu0 0.0
        %1478 = vmatpush1.msra.mxu0 0.0
        %1479 = vmatprep.subr.mxu0 0.0
        %1480 = vmatpush1.msra.mxu0 %v1035
        %1481 = vmatprep.subr.mxu0 0.0
        %1482 = vmatpush2.msra.mxu0 0.0
        %1483 = vmatprep.subr.mxu0 0.0
        %1484 = vmatpush2.msra.mxu0 0.0
        %1485 = vmatprep.subr.mxu0 0.0
        %1486 = vmatpush2.msra.mxu0 0.0
        %1487 = vmatprep.subr.mxu0 0.0
        %1488 = vmatpush2.msra.mxu0 0.0
        %1489 = vmatprep.subr.mxu0 0.0
        %1490 = vmatpush2.msra.mxu0 0.0
        %1491 = vmatprep.subr.mxu0 0.0
        %1492 = vmatpush2.msra.mxu0 0.0
        %1493 = vmatprep.subr.mxu0 0.0
        %1494 = vmatpush2.msra.mxu0 0.0
        %1495 = vmatprep.subr.mxu0 0.0
        %1496 = vmatpush2.msra.mxu0 0.0
        %1497 = vmatprep.subr.mxu0 0.0
        %1498 = vmatpush2.msra.mxu0 0.0
        %1499 = vmatprep.subr.mxu0 0.0
        %1500 = vmatpush2.msra.mxu0 0.0
        %1501 = vmatprep.subr.mxu0 0.0
        %1502 = vmatpush2.msra.mxu0 0.0
        %1503 = vmatprep.subr.mxu0 0.0
        %1504 = vmatpush2.msra.mxu0 0.0
        %1505 = vmatprep.subr.mxu0 0.0
        %1506 = vmatpush2.msra.mxu0 0.0
        %1507 = vmatprep.subr.mxu0 0.0
        %1508 = vmatpush2.msra.mxu0 0.0
        %1509 = vmatprep.subr.mxu0 0.0
        %1510 = vmatpush2.msra.mxu0 0.0
        %1511 = vmatprep.subr.mxu0 0.0
        %1512 = vmatpush2.msra.mxu0 0.0
        %1513 = vmatprep.mubr.f32.mxu0 0.0
        %1514 = vmatmul.mubr.f32.gmra.mxu0 %v1447
        %v1515 = vpop.f32.mrf.mxu0
        %v1516 = vadd.f32 %v1441, %v1515
        %v1517 = vpop.f32.mrf.mxu0
        %1518 = vdwg.mxu0
        %1519 = vrot.lane.b32.xlu0 %v589, 112
        %v1520 = vpop.permute.xlu0 %1519
        %1521 = vrot.lane.b32.xlu0 %v705, 112
        %v1522 = vpop.permute.xlu0 %1521
        %v1523 = vsel %vm715, %v1520, 0
        %v1525 = vsel %vm715, %v1522, 0
        %1527 = vmatprep.subr.mxu0 0.0
        %1528 = vmatpush1.xpose.msra.mxu0 0.0
        %1529 = vmatprep.subr.mxu0 0.0
        %1530 = vmatpush1.xpose.msra.mxu0 0.0
        %1531 = vmatprep.subr.mxu0 0.0
        %1532 = vmatpush1.xpose.msra.mxu0 0.0
        %1533 = vmatprep.subr.mxu0 0.0
        %1534 = vmatpush1.xpose.msra.mxu0 0.0
        %1535 = vmatprep.subr.mxu0 0.0
        %1536 = vmatpush1.xpose.msra.mxu0 0.0
        %1537 = vmatprep.subr.mxu0 0.0
        %1538 = vmatpush1.xpose.msra.mxu0 0.0
        %1539 = vmatprep.subr.mxu0 0.0
        %1540 = vmatpush1.xpose.msra.mxu0 0.0
        %1541 = vmatprep.subr.mxu0 0.0
        %1542 = vmatpush1.xpose.msra.mxu0 0.0
        %1543 = vmatprep.subr.mxu0 0.0
        %1544 = vmatpush1.xpose.msra.mxu0 0.0
        %1545 = vmatprep.subr.mxu0 0.0
        %1546 = vmatpush1.xpose.msra.mxu0 0.0
        %1547 = vmatprep.subr.mxu0 0.0
        %1548 = vmatpush1.xpose.msra.mxu0 0.0
        %1549 = vmatprep.subr.mxu0 0.0
        %1550 = vmatpush1.xpose.msra.mxu0 0.0
        %1551 = vmatprep.subr.mxu0 0.0
        %1552 = vmatpush1.xpose.msra.mxu0 0.0
        %1553 = vmatprep.subr.mxu0 0.0
        %1554 = vmatpush1.xpose.msra.mxu0 0.0
        %1555 = vmatprep.subr.mxu0 0.0
        %1556 = vmatpush1.xpose.msra.mxu0 0.0
        %1557 = vmatprep.subr.mxu0 0.0
        %1558 = vmatpush1.xpose.msra.mxu0 %v1525
        %1559 = vmatprep.subr.mxu0 0.0
        %1560 = vmatpush2.xpose.msra.mxu0 0.0
        %1561 = vmatprep.subr.mxu0 0.0
        %1562 = vmatpush2.xpose.msra.mxu0 0.0
        %1563 = vmatprep.subr.mxu0 0.0
        %1564 = vmatpush2.xpose.msra.mxu0 0.0
        %1565 = vmatprep.subr.mxu0 0.0
        %1566 = vmatpush2.xpose.msra.mxu0 0.0
        %1567 = vmatprep.subr.mxu0 0.0
        %1568 = vmatpush2.xpose.msra.mxu0 0.0
        %1569 = vmatprep.subr.mxu0 0.0
        %1570 = vmatpush2.xpose.msra.mxu0 0.0
        %1571 = vmatprep.subr.mxu0 0.0
        %1572 = vmatpush2.xpose.msra.mxu0 0.0
        %1573 = vmatprep.subr.mxu0 0.0
        %1574 = vmatpush2.xpose.msra.mxu0 0.0
        %1575 = vmatprep.subr.mxu0 0.0
        %1576 = vmatpush2.xpose.msra.mxu0 0.0
        %1577 = vmatprep.subr.mxu0 0.0
        %1578 = vmatpush2.xpose.msra.mxu0 0.0
        %1579 = vmatprep.subr.mxu0 0.0
        %1580 = vmatpush2.xpose.msra.mxu0 0.0
        %1581 = vmatprep.subr.mxu0 0.0
        %1582 = vmatpush2.xpose.msra.mxu0 0.0
        %1583 = vmatprep.subr.mxu0 0.0
        %1584 = vmatpush2.xpose.msra.mxu0 0.0
        %1585 = vmatprep.subr.mxu0 0.0
        %1586 = vmatpush2.xpose.msra.mxu0 0.0
        %1587 = vmatprep.subr.mxu0 0.0
        %1588 = vmatpush2.xpose.msra.mxu0 0.0
        %1589 = vmatprep.subr.mxu0 0.0
        %1590 = vmatpush2.xpose.msra.mxu0 0.0
        %1591 = vmatprep.mubr.f32.mxu0 0.0
        %1592 = vmatmul.mubr.f32.gmra.mxu0 %v1523
        %v1593 = vpop.f32.mrf.mxu0
        %v1594 = vadd.f32 0.0, %v1593
        %v1595 = vpop.f32.mrf.mxu0
        %1596 = vdwg.mxu0
        %1597 = vrot.lane.b32.xlu0 %v714, 112
        %v1598 = vpop.permute.xlu0 %1597
        %1599 = vrot.lane.b32.xlu0 %v706, 112
        %v1600 = vpop.permute.xlu0 %1599
        %v1601 = vsel %vm715, %v1598, 0
        %v1603 = vsel %vm715, %v1600, 0
        %1605 = vmatprep.subr.mxu0 0.0
        %1606 = vmatpush1.xpose.msra.mxu0 0.0
        %1607 = vmatprep.subr.mxu0 0.0
        %1608 = vmatpush1.xpose.msra.mxu0 0.0
        %1609 = vmatprep.subr.mxu0 0.0
        %1610 = vmatpush1.xpose.msra.mxu0 0.0
        %1611 = vmatprep.subr.mxu0 0.0
        %1612 = vmatpush1.xpose.msra.mxu0 0.0
        %1613 = vmatprep.subr.mxu0 0.0
        %1614 = vmatpush1.xpose.msra.mxu0 0.0
        %1615 = vmatprep.subr.mxu0 0.0
        %1616 = vmatpush1.xpose.msra.mxu0 0.0
        %1617 = vmatprep.subr.mxu0 0.0
        %1618 = vmatpush1.xpose.msra.mxu0 0.0
        %1619 = vmatprep.subr.mxu0 0.0
        %1620 = vmatpush1.xpose.msra.mxu0 0.0
        %1621 = vmatprep.subr.mxu0 0.0
        %1622 = vmatpush1.xpose.msra.mxu0 0.0
        %1623 = vmatprep.subr.mxu0 0.0
        %1624 = vmatpush1.xpose.msra.mxu0 0.0
        %1625 = vmatprep.subr.mxu0 0.0
        %1626 = vmatpush1.xpose.msra.mxu0 0.0
        %1627 = vmatprep.subr.mxu0 0.0
        %1628 = vmatpush1.xpose.msra.mxu0 0.0
        %1629 = vmatprep.subr.mxu0 0.0
        %1630 = vmatpush1.xpose.msra.mxu0 0.0
        %1631 = vmatprep.subr.mxu0 0.0
        %1632 = vmatpush1.xpose.msra.mxu0 0.0
        %1633 = vmatprep.subr.mxu0 0.0
        %1634 = vmatpush1.xpose.msra.mxu0 0.0
        %1635 = vmatprep.subr.mxu0 0.0
        %1636 = vmatpush1.xpose.msra.mxu0 %v1603
        %1637 = vmatprep.subr.mxu0 0.0
        %1638 = vmatpush2.xpose.msra.mxu0 0.0
        %1639 = vmatprep.subr.mxu0 0.0
        %1640 = vmatpush2.xpose.msra.mxu0 0.0
        %1641 = vmatprep.subr.mxu0 0.0
        %1642 = vmatpush2.xpose.msra.mxu0 0.0
        %1643 = vmatprep.subr.mxu0 0.0
        %1644 = vmatpush2.xpose.msra.mxu0 0.0
        %1645 = vmatprep.subr.mxu0 0.0
        %1646 = vmatpush2.xpose.msra.mxu0 0.0
        %1647 = vmatprep.subr.mxu0 0.0
        %1648 = vmatpush2.xpose.msra.mxu0 0.0
        %1649 = vmatprep.subr.mxu0 0.0
        %1650 = vmatpush2.xpose.msra.mxu0 0.0
        %1651 = vmatprep.subr.mxu0 0.0
        %1652 = vmatpush2.xpose.msra.mxu0 0.0
        %1653 = vmatprep.subr.mxu0 0.0
        %1654 = vmatpush2.xpose.msra.mxu0 0.0
        %1655 = vmatprep.subr.mxu0 0.0
        %1656 = vmatpush2.xpose.msra.mxu0 0.0
        %1657 = vmatprep.subr.mxu0 0.0
        %1658 = vmatpush2.xpose.msra.mxu0 0.0
        %1659 = vmatprep.subr.mxu0 0.0
        %1660 = vmatpush2.xpose.msra.mxu0 0.0
        %1661 = vmatprep.subr.mxu0 0.0
        %1662 = vmatpush2.xpose.msra.mxu0 0.0
        %1663 = vmatprep.subr.mxu0 0.0
        %1664 = vmatpush2.xpose.msra.mxu0 0.0
        %1665 = vmatprep.subr.mxu0 0.0
        %1666 = vmatpush2.xpose.msra.mxu0 0.0
        %1667 = vmatprep.subr.mxu0 0.0
        %1668 = vmatpush2.xpose.msra.mxu0 0.0
        %1669 = vmatprep.mubr.f32.mxu0 0.0
        %1670 = vmatmul.mubr.f32.gmra.mxu0 %v1601
        %v1671 = vpop.f32.mrf.mxu0
        %v1672 = vadd.f32 0.0, %v1671
        %v1673 = vpop.f32.mrf.mxu0
        %1674 = vdwg.mxu0
        %v1675 = vsel %vm866, %v1594, -inf
        %1676 = vmax.xlane.f32.xlu0 %v1675
        %v1677 = vpop.xlane.xlu0 %1676
        %v1678 = vsel %vm866, %v1672, -inf
        %1679 = vmax.xlane.f32.xlu0 %v1678
        %v1680 = vpop.xlane.xlu0 %1679
        %v1681 = vsub.f32 %v1594, %v1677
        %v1682 = vsub.f32 %v1672, %v1680
        %v1683 = vmul.f32 %v1681, 1.442695
        %v1684 = vpow.pop %v1683
        %v1685 = vmul.f32 %v1682, 1.442695
        %v1686 = vpow.pop %v1685
        %v1687 = vsel %vm866, %v1684, 0.0
        %1688 = vadd.xlane.f32.xlu0 %v1687
        %v1689 = vpop.xlane.xlu0 %1688
        %v1690 = vsel %vm866, %v1686, 0.0
        %1691 = vadd.xlane.f32.xlu0 %v1690
        %v1692 = vpop.xlane.xlu0 %1691
        %v1693 = vrcp.pop %v1689
        %v1694 = vrcp.pop %v1692
        %v1695 = vmul.f32 %v1684, %v1693
        %v1696 = vmul.f32 %v1686, %v1694
        %1697 = vrot.lane.b32.xlu0 %v711, 112
        %v1698 = vpop.permute.xlu0 %1697
        %v1701 = vsel %vm715, %v1695, 0
        %1703 = vmatprep.subr.mxu0 0.0
        %1704 = vmatpush1.msra.mxu0 0.0
        %1705 = vmatprep.subr.mxu0 0.0
        %1706 = vmatpush1.msra.mxu0 0.0
        %1707 = vmatprep.subr.mxu0 0.0
        %1708 = vmatpush1.msra.mxu0 0.0
        %1709 = vmatprep.subr.mxu0 0.0
        %1710 = vmatpush1.msra.mxu0 0.0
        %1711 = vmatprep.subr.mxu0 0.0
        %1712 = vmatpush1.msra.mxu0 0.0
        %1713 = vmatprep.subr.mxu0 0.0
        %1714 = vmatpush1.msra.mxu0 0.0
        %1715 = vmatprep.subr.mxu0 0.0
        %1716 = vmatpush1.msra.mxu0 0.0
        %1717 = vmatprep.subr.mxu0 0.0
        %1718 = vmatpush1.msra.mxu0 0.0
        %1719 = vmatprep.subr.mxu0 0.0
        %1720 = vmatpush1.msra.mxu0 0.0
        %1721 = vmatprep.subr.mxu0 0.0
        %1722 = vmatpush1.msra.mxu0 0.0
        %1723 = vmatprep.subr.mxu0 0.0
        %1724 = vmatpush1.msra.mxu0 0.0
        %1725 = vmatprep.subr.mxu0 0.0
        %1726 = vmatpush1.msra.mxu0 0.0
        %1727 = vmatprep.subr.mxu0 0.0
        %1728 = vmatpush1.msra.mxu0 0.0
        %1729 = vmatprep.subr.mxu0 0.0
        %1730 = vmatpush1.msra.mxu0 0.0
        %1731 = vmatprep.subr.mxu0 0.0
        %1732 = vmatpush1.msra.mxu0 0.0
        %1733 = vmatprep.subr.mxu0 0.0
        %1734 = vmatpush1.msra.mxu0 %v1698
        %1735 = vmatprep.subr.mxu0 0.0
        %1736 = vmatpush2.msra.mxu0 0.0
        %1737 = vmatprep.subr.mxu0 0.0
        %1738 = vmatpush2.msra.mxu0 0.0
        %1739 = vmatprep.subr.mxu0 0.0
        %1740 = vmatpush2.msra.mxu0 0.0
        %1741 = vmatprep.subr.mxu0 0.0
        %1742 = vmatpush2.msra.mxu0 0.0
        %1743 = vmatprep.subr.mxu0 0.0
        %1744 = vmatpush2.msra.mxu0 0.0
        %1745 = vmatprep.subr.mxu0 0.0
        %1746 = vmatpush2.msra.mxu0 0.0
        %1747 = vmatprep.subr.mxu0 0.0
        %1748 = vmatpush2.msra.mxu0 0.0
        %1749 = vmatprep.subr.mxu0 0.0
        %1750 = vmatpush2.msra.mxu0 0.0
        %1751 = vmatprep.subr.mxu0 0.0
        %1752 = vmatpush2.msra.mxu0 0.0
        %1753 = vmatprep.subr.mxu0 0.0
        %1754 = vmatpush2.msra.mxu0 0.0
        %1755 = vmatprep.subr.mxu0 0.0
        %1756 = vmatpush2.msra.mxu0 0.0
        %1757 = vmatprep.subr.mxu0 0.0
        %1758 = vmatpush2.msra.mxu0 0.0
        %1759 = vmatprep.subr.mxu0 0.0
        %1760 = vmatpush2.msra.mxu0 0.0
        %1761 = vmatprep.subr.mxu0 0.0
        %1762 = vmatpush2.msra.mxu0 0.0
        %1763 = vmatprep.subr.mxu0 0.0
        %1764 = vmatpush2.msra.mxu0 0.0
        %1765 = vmatprep.subr.mxu0 0.0
        %1766 = vmatpush2.msra.mxu0 0.0
        %1767 = vmatprep.mubr.f32.mxu0 0.0
        %1768 = vmatmul.mubr.f32.gmra.mxu0 %v1701
        %v1769 = vpop.f32.mrf.mxu0
        %v1770 = vadd.f32 0.0, %v1769
        %v1771 = vpop.f32.mrf.mxu0
        %1772 = vdwg.mxu0
        %1773 = vrot.lane.b32.xlu0 %v712, 112
        %v1774 = vpop.permute.xlu0 %1773
        %v1777 = vsel %vm715, %v1696, 0
        %1779 = vmatprep.subr.mxu0 0.0
        %1780 = vmatpush1.msra.mxu0 0.0
        %1781 = vmatprep.subr.mxu0 0.0
        %1782 = vmatpush1.msra.mxu0 0.0
        %1783 = vmatprep.subr.mxu0 0.0
        %1784 = vmatpush1.msra.mxu0 0.0
        %1785 = vmatprep.subr.mxu0 0.0
        %1786 = vmatpush1.msra.mxu0 0.0
        %1787 = vmatprep.subr.mxu0 0.0
        %1788 = vmatpush1.msra.mxu0 0.0
        %1789 = vmatprep.subr.mxu0 0.0
        %1790 = vmatpush1.msra.mxu0 0.0
        %1791 = vmatprep.subr.mxu0 0.0
        %1792 = vmatpush1.msra.mxu0 0.0
        %1793 = vmatprep.subr.mxu0 0.0
        %1794 = vmatpush1.msra.mxu0 0.0
        %1795 = vmatprep.subr.mxu0 0.0
        %1796 = vmatpush1.msra.mxu0 0.0
        %1797 = vmatprep.subr.mxu0 0.0
        %1798 = vmatpush1.msra.mxu0 0.0
        %1799 = vmatprep.subr.mxu0 0.0
        %1800 = vmatpush1.msra.mxu0 0.0
        %1801 = vmatprep.subr.mxu0 0.0
        %1802 = vmatpush1.msra.mxu0 0.0
        %1803 = vmatprep.subr.mxu0 0.0
        %1804 = vmatpush1.msra.mxu0 0.0
        %1805 = vmatprep.subr.mxu0 0.0
        %1806 = vmatpush1.msra.mxu0 0.0
        %1807 = vmatprep.subr.mxu0 0.0
        %1808 = vmatpush1.msra.mxu0 0.0
        %1809 = vmatprep.subr.mxu0 0.0
        %1810 = vmatpush1.msra.mxu0 %v1774
        %1811 = vmatprep.subr.mxu0 0.0
        %1812 = vmatpush2.msra.mxu0 0.0
        %1813 = vmatprep.subr.mxu0 0.0
        %1814 = vmatpush2.msra.mxu0 0.0
        %1815 = vmatprep.subr.mxu0 0.0
        %1816 = vmatpush2.msra.mxu0 0.0
        %1817 = vmatprep.subr.mxu0 0.0
        %1818 = vmatpush2.msra.mxu0 0.0
        %1819 = vmatprep.subr.mxu0 0.0
        %1820 = vmatpush2.msra.mxu0 0.0
        %1821 = vmatprep.subr.mxu0 0.0
        %1822 = vmatpush2.msra.mxu0 0.0
        %1823 = vmatprep.subr.mxu0 0.0
        %1824 = vmatpush2.msra.mxu0 0.0
        %1825 = vmatprep.subr.mxu0 0.0
        %1826 = vmatpush2.msra.mxu0 0.0
        %1827 = vmatprep.subr.mxu0 0.0
        %1828 = vmatpush2.msra.mxu0 0.0
        %1829 = vmatprep.subr.mxu0 0.0
        %1830 = vmatpush2.msra.mxu0 0.0
        %1831 = vmatprep.subr.mxu0 0.0
        %1832 = vmatpush2.msra.mxu0 0.0
        %1833 = vmatprep.subr.mxu0 0.0
        %1834 = vmatpush2.msra.mxu0 0.0
        %1835 = vmatprep.subr.mxu0 0.0
        %1836 = vmatpush2.msra.mxu0 0.0
        %1837 = vmatprep.subr.mxu0 0.0
        %1838 = vmatpush2.msra.mxu0 0.0
        %1839 = vmatprep.subr.mxu0 0.0
        %1840 = vmatpush2.msra.mxu0 0.0
        %1841 = vmatprep.subr.mxu0 0.0
        %1842 = vmatpush2.msra.mxu0 0.0
        %1843 = vmatprep.mubr.f32.mxu0 0.0
        %1844 = vmatmul.mubr.f32.gmra.mxu0 %v1777
        %v1845 = vpop.f32.mrf.mxu0
        %v1846 = vadd.f32 0.0, %v1845
        %v1847 = vpop.f32.mrf.mxu0
        %1848 = vdwg.mxu0
        %v1849 = vld [vmem:[#allocation13 + $0x10] sm:$0xff]
        %v1852 = vcombine.low %v1770, %v1846
        %v1853 = vsel %vm715, %v1852, 0
        %1855 = vmatprep.subr.mxu0 0.0
        %1856 = vmatpush1.msra.mxu0 0.0
        %1857 = vmatprep.subr.mxu0 0.0
        %1858 = vmatpush1.msra.mxu0 0.0
        %1859 = vmatprep.subr.mxu0 0.0
        %1860 = vmatpush1.msra.mxu0 0.0
        %1861 = vmatprep.subr.mxu0 0.0
        %1862 = vmatpush1.msra.mxu0 0.0
        %1863 = vmatprep.subr.mxu0 0.0
        %1864 = vmatpush1.msra.mxu0 0.0
        %1865 = vmatprep.subr.mxu0 0.0
        %1866 = vmatpush1.msra.mxu0 0.0
        %1867 = vmatprep.subr.mxu0 0.0
        %1868 = vmatpush1.msra.mxu0 0.0
        %1869 = vmatprep.subr.mxu0 0.0
        %1870 = vmatpush1.msra.mxu0 0.0
        %1871 = vmatprep.subr.mxu0 0.0
        %1872 = vmatpush1.msra.mxu0 0.0
        %1873 = vmatprep.subr.mxu0 0.0
        %1874 = vmatpush1.msra.mxu0 0.0
        %1875 = vmatprep.subr.mxu0 0.0
        %1876 = vmatpush1.msra.mxu0 0.0
        %1877 = vmatprep.subr.mxu0 0.0
        %1878 = vmatpush1.msra.mxu0 0.0
        %1879 = vmatprep.subr.mxu0 0.0
        %1880 = vmatpush1.msra.mxu0 0.0
        %1881 = vmatprep.subr.mxu0 0.0
        %1882 = vmatpush1.msra.mxu0 0.0
        %1883 = vmatprep.subr.mxu0 0.0
        %1884 = vmatpush1.msra.mxu0 0.0
        %1885 = vmatprep.subr.mxu0 0.0
        %1886 = vmatpush1.msra.mxu0 %v1849
        %1887 = vmatprep.subr.mxu0 0.0
        %1888 = vmatpush2.msra.mxu0 0.0
        %1889 = vmatprep.subr.mxu0 0.0
        %1890 = vmatpush2.msra.mxu0 0.0
        %1891 = vmatprep.subr.mxu0 0.0
        %1892 = vmatpush2.msra.mxu0 0.0
        %1893 = vmatprep.subr.mxu0 0.0
        %1894 = vmatpush2.msra.mxu0 0.0
        %1895 = vmatprep.subr.mxu0 0.0
        %1896 = vmatpush2.msra.mxu0 0.0
        %1897 = vmatprep.subr.mxu0 0.0
        %1898 = vmatpush2.msra.mxu0 0.0
        %1899 = vmatprep.subr.mxu0 0.0
        %1900 = vmatpush2.msra.mxu0 0.0
        %1901 = vmatprep.subr.mxu0 0.0
        %1902 = vmatpush2.msra.mxu0 0.0
        %1903 = vmatprep.subr.mxu0 0.0
        %1904 = vmatpush2.msra.mxu0 0.0
        %1905 = vmatprep.subr.mxu0 0.0
        %1906 = vmatpush2.msra.mxu0 0.0
        %1907 = vmatprep.subr.mxu0 0.0
        %1908 = vmatpush2.msra.mxu0 0.0
        %1909 = vmatprep.subr.mxu0 0.0
        %1910 = vmatpush2.msra.mxu0 0.0
        %1911 = vmatprep.subr.mxu0 0.0
        %1912 = vmatpush2.msra.mxu0 0.0
        %1913 = vmatprep.subr.mxu0 0.0
        %1914 = vmatpush2.msra.mxu0 0.0
        %1915 = vmatprep.subr.mxu0 0.0
        %1916 = vmatpush2.msra.mxu0 0.0
        %1917 = vmatprep.subr.mxu0 0.0
        %1918 = vmatpush2.msra.mxu0 0.0
        %1919 = vmatprep.mubr.f32.mxu0 0.0
        %1920 = vmatmul.mubr.f32.gmra.mxu0 %v1853
        %v1921 = vpop.f32.mrf.mxu0
        %v1922 = vadd.f32 0.0, %v1921
        %v1923 = vpop.f32.mrf.mxu0
        %1924 = vdwg.mxu0
        %v1925 = vadd.f32 %v1516, %v1922
        %1926 = vrot.lane.b32.xlu0 %v589, 104
        %v1927 = vpop.permute.xlu0 %1926
        %1928 = vrot.lane.b32.xlu0 %v705, 104
        %v1929 = vpop.permute.xlu0 %1928
        %v1930 = vsel %vm715, %v1927, 0
        %v1932 = vsel %vm715, %v1929, 0
        %1934 = vmatprep.subr.mxu0 0.0
        %1935 = vmatpush1.xpose.msra.mxu0 0.0
        %1936 = vmatprep.subr.mxu0 0.0
        %1937 = vmatpush1.xpose.msra.mxu0 0.0
        %1938 = vmatprep.subr.mxu0 0.0
        %1939 = vmatpush1.xpose.msra.mxu0 0.0
        %1940 = vmatprep.subr.mxu0 0.0
        %1941 = vmatpush1.xpose.msra.mxu0 0.0
        %1942 = vmatprep.subr.mxu0 0.0
        %1943 = vmatpush1.xpose.msra.mxu0 0.0
        %1944 = vmatprep.subr.mxu0 0.0
        %1945 = vmatpush1.xpose.msra.mxu0 0.0
        %1946 = vmatprep.subr.mxu0 0.0
        %1947 = vmatpush1.xpose.msra.mxu0 0.0
        %1948 = vmatprep.subr.mxu0 0.0
        %1949 = vmatpush1.xpose.msra.mxu0 0.0
        %1950 = vmatprep.subr.mxu0 0.0
        %1951 = vmatpush1.xpose.msra.mxu0 0.0
        %1952 = vmatprep.subr.mxu0 0.0
        %1953 = vmatpush1.xpose.msra.mxu0 0.0
        %1954 = vmatprep.subr.mxu0 0.0
        %1955 = vmatpush1.xpose.msra.mxu0 0.0
        %1956 = vmatprep.subr.mxu0 0.0
        %1957 = vmatpush1.xpose.msra.mxu0 0.0
        %1958 = vmatprep.subr.mxu0 0.0
        %1959 = vmatpush1.xpose.msra.mxu0 0.0
        %1960 = vmatprep.subr.mxu0 0.0
        %1961 = vmatpush1.xpose.msra.mxu0 0.0
        %1962 = vmatprep.subr.mxu0 0.0
        %1963 = vmatpush1.xpose.msra.mxu0 0.0
        %1964 = vmatprep.subr.mxu0 0.0
        %1965 = vmatpush1.xpose.msra.mxu0 %v1932
        %1966 = vmatprep.subr.mxu0 0.0
        %1967 = vmatpush2.xpose.msra.mxu0 0.0
        %1968 = vmatprep.subr.mxu0 0.0
        %1969 = vmatpush2.xpose.msra.mxu0 0.0
        %1970 = vmatprep.subr.mxu0 0.0
        %1971 = vmatpush2.xpose.msra.mxu0 0.0
        %1972 = vmatprep.subr.mxu0 0.0
        %1973 = vmatpush2.xpose.msra.mxu0 0.0
        %1974 = vmatprep.subr.mxu0 0.0
        %1975 = vmatpush2.xpose.msra.mxu0 0.0
        %1976 = vmatprep.subr.mxu0 0.0
        %1977 = vmatpush2.xpose.msra.mxu0 0.0
        %1978 = vmatprep.subr.mxu0 0.0
        %1979 = vmatpush2.xpose.msra.mxu0 0.0
        %1980 = vmatprep.subr.mxu0 0.0
        %1981 = vmatpush2.xpose.msra.mxu0 0.0
        %1982 = vmatprep.subr.mxu0 0.0
        %1983 = vmatpush2.xpose.msra.mxu0 0.0
        %1984 = vmatprep.subr.mxu0 0.0
        %1985 = vmatpush2.xpose.msra.mxu0 0.0
        %1986 = vmatprep.subr.mxu0 0.0
        %1987 = vmatpush2.xpose.msra.mxu0 0.0
        %1988 = vmatprep.subr.mxu0 0.0
        %1989 = vmatpush2.xpose.msra.mxu0 0.0
        %1990 = vmatprep.subr.mxu0 0.0
        %1991 = vmatpush2.xpose.msra.mxu0 0.0
        %1992 = vmatprep.subr.mxu0 0.0
        %1993 = vmatpush2.xpose.msra.mxu0 0.0
        %1994 = vmatprep.subr.mxu0 0.0
        %1995 = vmatpush2.xpose.msra.mxu0 0.0
        %1996 = vmatprep.subr.mxu0 0.0
        %1997 = vmatpush2.xpose.msra.mxu0 0.0
        %1998 = vmatprep.mubr.f32.mxu0 0.0
        %1999 = vmatmul.mubr.f32.gmra.mxu0 %v1930
        %v2000 = vpop.f32.mrf.mxu0
        %v2001 = vadd.f32 0.0, %v2000
        %v2002 = vpop.f32.mrf.mxu0
        %2003 = vdwg.mxu0
        %2004 = vrot.lane.b32.xlu0 %v714, 104
        %v2005 = vpop.permute.xlu0 %2004
        %2006 = vrot.lane.b32.xlu0 %v706, 104
        %v2007 = vpop.permute.xlu0 %2006
        %v2008 = vsel %vm715, %v2005, 0
        %v2010 = vsel %vm715, %v2007, 0
        %2012 = vmatprep.subr.mxu0 0.0
        %2013 = vmatpush1.xpose.msra.mxu0 0.0
        %2014 = vmatprep.subr.mxu0 0.0
        %2015 = vmatpush1.xpose.msra.mxu0 0.0
        %2016 = vmatprep.subr.mxu0 0.0
        %2017 = vmatpush1.xpose.msra.mxu0 0.0
        %2018 = vmatprep.subr.mxu0 0.0
        %2019 = vmatpush1.xpose.msra.mxu0 0.0
        %2020 = vmatprep.subr.mxu0 0.0
        %2021 = vmatpush1.xpose.msra.mxu0 0.0
        %2022 = vmatprep.subr.mxu0 0.0
        %2023 = vmatpush1.xpose.msra.mxu0 0.0
        %2024 = vmatprep.subr.mxu0 0.0
        %2025 = vmatpush1.xpose.msra.mxu0 0.0
        %2026 = vmatprep.subr.mxu0 0.0
        %2027 = vmatpush1.xpose.msra.mxu0 0.0
        %2028 = vmatprep.subr.mxu0 0.0
        %2029 = vmatpush1.xpose.msra.mxu0 0.0
        %2030 = vmatprep.subr.mxu0 0.0
        %2031 = vmatpush1.xpose.msra.mxu0 0.0
        %2032 = vmatprep.subr.mxu0 0.0
        %2033 = vmatpush1.xpose.msra.mxu0 0.0
        %2034 = vmatprep.subr.mxu0 0.0
        %2035 = vmatpush1.xpose.msra.mxu0 0.0
        %2036 = vmatprep.subr.mxu0 0.0
        %2037 = vmatpush1.xpose.msra.mxu0 0.0
        %2038 = vmatprep.subr.mxu0 0.0
        %2039 = vmatpush1.xpose.msra.mxu0 0.0
        %2040 = vmatprep.subr.mxu0 0.0
        %2041 = vmatpush1.xpose.msra.mxu0 0.0
        %2042 = vmatprep.subr.mxu0 0.0
        %2043 = vmatpush1.xpose.msra.mxu0 %v2010
        %2044 = vmatprep.subr.mxu0 0.0
        %2045 = vmatpush2.xpose.msra.mxu0 0.0
        %2046 = vmatprep.subr.mxu0 0.0
        %2047 = vmatpush2.xpose.msra.mxu0 0.0
        %2048 = vmatprep.subr.mxu0 0.0
        %2049 = vmatpush2.xpose.msra.mxu0 0.0
        %2050 = vmatprep.subr.mxu0 0.0
        %2051 = vmatpush2.xpose.msra.mxu0 0.0
        %2052 = vmatprep.subr.mxu0 0.0
        %2053 = vmatpush2.xpose.msra.mxu0 0.0
        %2054 = vmatprep.subr.mxu0 0.0
        %2055 = vmatpush2.xpose.msra.mxu0 0.0
        %2056 = vmatprep.subr.mxu0 0.0
        %2057 = vmatpush2.xpose.msra.mxu0 0.0
        %2058 = vmatprep.subr.mxu0 0.0
        %2059 = vmatpush2.xpose.msra.mxu0 0.0
        %2060 = vmatprep.subr.mxu0 0.0
        %2061 = vmatpush2.xpose.msra.mxu0 0.0
        %2062 = vmatprep.subr.mxu0 0.0
        %2063 = vmatpush2.xpose.msra.mxu0 0.0
        %2064 = vmatprep.subr.mxu0 0.0
        %2065 = vmatpush2.xpose.msra.mxu0 0.0
        %2066 = vmatprep.subr.mxu0 0.0
        %2067 = vmatpush2.xpose.msra.mxu0 0.0
        %2068 = vmatprep.subr.mxu0 0.0
        %2069 = vmatpush2.xpose.msra.mxu0 0.0
        %2070 = vmatprep.subr.mxu0 0.0
        %2071 = vmatpush2.xpose.msra.mxu0 0.0
        %2072 = vmatprep.subr.mxu0 0.0
        %2073 = vmatpush2.xpose.msra.mxu0 0.0
        %2074 = vmatprep.subr.mxu0 0.0
        %2075 = vmatpush2.xpose.msra.mxu0 0.0
        %2076 = vmatprep.mubr.f32.mxu0 0.0
        %2077 = vmatmul.mubr.f32.gmra.mxu0 %v2008
        %v2078 = vpop.f32.mrf.mxu0
        %v2079 = vadd.f32 0.0, %v2078
        %v2080 = vpop.f32.mrf.mxu0
        %2081 = vdwg.mxu0
        %v2082 = vsel %vm866, %v2001, -inf
        %2083 = vmax.xlane.f32.xlu0 %v2082
        %v2084 = vpop.xlane.xlu0 %2083
        %v2085 = vsel %vm866, %v2079, -inf
        %2086 = vmax.xlane.f32.xlu0 %v2085
        %v2087 = vpop.xlane.xlu0 %2086
        %v2088 = vsub.f32 %v2001, %v2084
        %v2089 = vsub.f32 %v2079, %v2087
        %v2090 = vmul.f32 %v2088, 1.442695
        %v2091 = vpow.pop %v2090
        %v2092 = vmul.f32 %v2089, 1.442695
        %v2093 = vpow.pop %v2092
        %v2094 = vsel %vm866, %v2091, 0.0
        %2095 = vadd.xlane.f32.xlu0 %v2094
        %v2096 = vpop.xlane.xlu0 %2095
        %v2097 = vsel %vm866, %v2093, 0.0
        %2098 = vadd.xlane.f32.xlu0 %v2097
        %v2099 = vpop.xlane.xlu0 %2098
        %v2100 = vrcp.pop %v2096
        %v2101 = vrcp.pop %v2099
        %v2102 = vmul.f32 %v2091, %v2100
        %v2103 = vmul.f32 %v2093, %v2101
        %2104 = vrot.lane.b32.xlu0 %v711, 104
        %v2105 = vpop.permute.xlu0 %2104
        %v2108 = vsel %vm715, %v2102, 0
        %2110 = vmatprep.subr.mxu0 0.0
        %2111 = vmatpush1.msra.mxu0 0.0
        %2112 = vmatprep.subr.mxu0 0.0
        %2113 = vmatpush1.msra.mxu0 0.0
        %2114 = vmatprep.subr.mxu0 0.0
        %2115 = vmatpush1.msra.mxu0 0.0
        %2116 = vmatprep.subr.mxu0 0.0
        %2117 = vmatpush1.msra.mxu0 0.0
        %2118 = vmatprep.subr.mxu0 0.0
        %2119 = vmatpush1.msra.mxu0 0.0
        %2120 = vmatprep.subr.mxu0 0.0
        %2121 = vmatpush1.msra.mxu0 0.0
        %2122 = vmatprep.subr.mxu0 0.0
        %2123 = vmatpush1.msra.mxu0 0.0
        %2124 = vmatprep.subr.mxu0 0.0
        %2125 = vmatpush1.msra.mxu0 0.0
        %2126 = vmatprep.subr.mxu0 0.0
        %2127 = vmatpush1.msra.mxu0 0.0
        %2128 = vmatprep.subr.mxu0 0.0
        %2129 = vmatpush1.msra.mxu0 0.0
        %2130 = vmatprep.subr.mxu0 0.0
        %2131 = vmatpush1.msra.mxu0 0.0
        %2132 = vmatprep.subr.mxu0 0.0
        %2133 = vmatpush1.msra.mxu0 0.0
        %2134 = vmatprep.subr.mxu0 0.0
        %2135 = vmatpush1.msra.mxu0 0.0
        %2136 = vmatprep.subr.mxu0 0.0
        %2137 = vmatpush1.msra.mxu0 0.0
        %2138 = vmatprep.subr.mxu0 0.0
        %2139 = vmatpush1.msra.mxu0 0.0
        %2140 = vmatprep.subr.mxu0 0.0
        %2141 = vmatpush1.msra.mxu0 %v2105
        %2142 = vmatprep.subr.mxu0 0.0
        %2143 = vmatpush2.msra.mxu0 0.0
        %2144 = vmatprep.subr.mxu0 0.0
        %2145 = vmatpush2.msra.mxu0 0.0
        %2146 = vmatprep.subr.mxu0 0.0
        %2147 = vmatpush2.msra.mxu0 0.0
        %2148 = vmatprep.subr.mxu0 0.0
        %2149 = vmatpush2.msra.mxu0 0.0
        %2150 = vmatprep.subr.mxu0 0.0
        %2151 = vmatpush2.msra.mxu0 0.0
        %2152 = vmatprep.subr.mxu0 0.0
        %2153 = vmatpush2.msra.mxu0 0.0
        %2154 = vmatprep.subr.mxu0 0.0
        %2155 = vmatpush2.msra.mxu0 0.0
        %2156 = vmatprep.subr.mxu0 0.0
        %2157 = vmatpush2.msra.mxu0 0.0
        %2158 = vmatprep.subr.mxu0 0.0
        %2159 = vmatpush2.msra.mxu0 0.0
        %2160 = vmatprep.subr.mxu0 0.0
        %2161 = vmatpush2.msra.mxu0 0.0
        %2162 = vmatprep.subr.mxu0 0.0
        %2163 = vmatpush2.msra.mxu0 0.0
        %2164 = vmatprep.subr.mxu0 0.0
        %2165 = vmatpush2.msra.mxu0 0.0
        %2166 = vmatprep.subr.mxu0 0.0
        %2167 = vmatpush2.msra.mxu0 0.0
        %2168 = vmatprep.subr.mxu0 0.0
        %2169 = vmatpush2.msra.mxu0 0.0
        %2170 = vmatprep.subr.mxu0 0.0
        %2171 = vmatpush2.msra.mxu0 0.0
        %2172 = vmatprep.subr.mxu0 0.0
        %2173 = vmatpush2.msra.mxu0 0.0
        %2174 = vmatprep.mubr.f32.mxu0 0.0
        %2175 = vmatmul.mubr.f32.gmra.mxu0 %v2108
        %v2176 = vpop.f32.mrf.mxu0
        %v2177 = vadd.f32 0.0, %v2176
        %v2178 = vpop.f32.mrf.mxu0
        %2179 = vdwg.mxu0
        %2180 = vrot.lane.b32.xlu0 %v712, 104
        %v2181 = vpop.permute.xlu0 %2180
        %v2184 = vsel %vm715, %v2103, 0
        %2186 = vmatprep.subr.mxu0 0.0
        %2187 = vmatpush1.msra.mxu0 0.0
        %2188 = vmatprep.subr.mxu0 0.0
        %2189 = vmatpush1.msra.mxu0 0.0
        %2190 = vmatprep.subr.mxu0 0.0
        %2191 = vmatpush1.msra.mxu0 0.0
        %2192 = vmatprep.subr.mxu0 0.0
        %2193 = vmatpush1.msra.mxu0 0.0
        %2194 = vmatprep.subr.mxu0 0.0
        %2195 = vmatpush1.msra.mxu0 0.0
        %2196 = vmatprep.subr.mxu0 0.0
        %2197 = vmatpush1.msra.mxu0 0.0
        %2198 = vmatprep.subr.mxu0 0.0
        %2199 = vmatpush1.msra.mxu0 0.0
        %2200 = vmatprep.subr.mxu0 0.0
        %2201 = vmatpush1.msra.mxu0 0.0
        %2202 = vmatprep.subr.mxu0 0.0
        %2203 = vmatpush1.msra.mxu0 0.0
        %2204 = vmatprep.subr.mxu0 0.0
        %2205 = vmatpush1.msra.mxu0 0.0
        %2206 = vmatprep.subr.mxu0 0.0
        %2207 = vmatpush1.msra.mxu0 0.0
        %2208 = vmatprep.subr.mxu0 0.0
        %2209 = vmatpush1.msra.mxu0 0.0
        %2210 = vmatprep.subr.mxu0 0.0
        %2211 = vmatpush1.msra.mxu0 0.0
        %2212 = vmatprep.subr.mxu0 0.0
        %2213 = vmatpush1.msra.mxu0 0.0
        %2214 = vmatprep.subr.mxu0 0.0
        %2215 = vmatpush1.msra.mxu0 0.0
        %2216 = vmatprep.subr.mxu0 0.0
        %2217 = vmatpush1.msra.mxu0 %v2181
        %2218 = vmatprep.subr.mxu0 0.0
        %2219 = vmatpush2.msra.mxu0 0.0
        %2220 = vmatprep.subr.mxu0 0.0
        %2221 = vmatpush2.msra.mxu0 0.0
        %2222 = vmatprep.subr.mxu0 0.0
        %2223 = vmatpush2.msra.mxu0 0.0
        %2224 = vmatprep.subr.mxu0 0.0
        %2225 = vmatpush2.msra.mxu0 0.0
        %2226 = vmatprep.subr.mxu0 0.0
        %2227 = vmatpush2.msra.mxu0 0.0
        %2228 = vmatprep.subr.mxu0 0.0
        %2229 = vmatpush2.msra.mxu0 0.0
        %2230 = vmatprep.subr.mxu0 0.0
        %2231 = vmatpush2.msra.mxu0 0.0
        %2232 = vmatprep.subr.mxu0 0.0
        %2233 = vmatpush2.msra.mxu0 0.0
        %2234 = vmatprep.subr.mxu0 0.0
        %2235 = vmatpush2.msra.mxu0 0.0
        %2236 = vmatprep.subr.mxu0 0.0
        %2237 = vmatpush2.msra.mxu0 0.0
        %2238 = vmatprep.subr.mxu0 0.0
        %2239 = vmatpush2.msra.mxu0 0.0
        %2240 = vmatprep.subr.mxu0 0.0
        %2241 = vmatpush2.msra.mxu0 0.0
        %2242 = vmatprep.subr.mxu0 0.0
        %2243 = vmatpush2.msra.mxu0 0.0
        %2244 = vmatprep.subr.mxu0 0.0
        %2245 = vmatpush2.msra.mxu0 0.0
        %2246 = vmatprep.subr.mxu0 0.0
        %2247 = vmatpush2.msra.mxu0 0.0
        %2248 = vmatprep.subr.mxu0 0.0
        %2249 = vmatpush2.msra.mxu0 0.0
        %2250 = vmatprep.mubr.f32.mxu0 0.0
        %2251 = vmatmul.mubr.f32.gmra.mxu0 %v2184
        %v2252 = vpop.f32.mrf.mxu0
        %v2253 = vadd.f32 0.0, %v2252
        %v2254 = vpop.f32.mrf.mxu0
        %2255 = vdwg.mxu0
        %v2256 = vld [vmem:[#allocation13 + $0x18] sm:$0xff]
        %v2259 = vcombine.low %v2177, %v2253
        %v2260 = vsel %vm715, %v2259, 0
        %2262 = vmatprep.subr.mxu0 0.0
        %2263 = vmatpush1.msra.mxu0 0.0
        %2264 = vmatprep.subr.mxu0 0.0
        %2265 = vmatpush1.msra.mxu0 0.0
        %2266 = vmatprep.subr.mxu0 0.0
        %2267 = vmatpush1.msra.mxu0 0.0
        %2268 = vmatprep.subr.mxu0 0.0
        %2269 = vmatpush1.msra.mxu0 0.0
        %2270 = vmatprep.subr.mxu0 0.0
        %2271 = vmatpush1.msra.mxu0 0.0
        %2272 = vmatprep.subr.mxu0 0.0
        %2273 = vmatpush1.msra.mxu0 0.0
        %2274 = vmatprep.subr.mxu0 0.0
        %2275 = vmatpush1.msra.mxu0 0.0
        %2276 = vmatprep.subr.mxu0 0.0
        %2277 = vmatpush1.msra.mxu0 0.0
        %2278 = vmatprep.subr.mxu0 0.0
        %2279 = vmatpush1.msra.mxu0 0.0
        %2280 = vmatprep.subr.mxu0 0.0
        %2281 = vmatpush1.msra.mxu0 0.0
        %2282 = vmatprep.subr.mxu0 0.0
        %2283 = vmatpush1.msra.mxu0 0.0
        %2284 = vmatprep.subr.mxu0 0.0
        %2285 = vmatpush1.msra.mxu0 0.0
        %2286 = vmatprep.subr.mxu0 0.0
        %2287 = vmatpush1.msra.mxu0 0.0
        %2288 = vmatprep.subr.mxu0 0.0
        %2289 = vmatpush1.msra.mxu0 0.0
        %2290 = vmatprep.subr.mxu0 0.0
        %2291 = vmatpush1.msra.mxu0 0.0
        %2292 = vmatprep.subr.mxu0 0.0
        %2293 = vmatpush1.msra.mxu0 %v2256
        %2294 = vmatprep.subr.mxu0 0.0
        %2295 = vmatpush2.msra.mxu0 0.0
        %2296 = vmatprep.subr.mxu0 0.0
        %2297 = vmatpush2.msra.mxu0 0.0
        %2298 = vmatprep.subr.mxu0 0.0
        %2299 = vmatpush2.msra.mxu0 0.0
        %2300 = vmatprep.subr.mxu0 0.0
        %2301 = vmatpush2.msra.mxu0 0.0
        %2302 = vmatprep.subr.mxu0 0.0
        %2303 = vmatpush2.msra.mxu0 0.0
        %2304 = vmatprep.subr.mxu0 0.0
        %2305 = vmatpush2.msra.mxu0 0.0
        %2306 = vmatprep.subr.mxu0 0.0
        %2307 = vmatpush2.msra.mxu0 0.0
        %2308 = vmatprep.subr.mxu0 0.0
        %2309 = vmatpush2.msra.mxu0 0.0
        %2310 = vmatprep.subr.mxu0 0.0
        %2311 = vmatpush2.msra.mxu0 0.0
        %2312 = vmatprep.subr.mxu0 0.0
        %2313 = vmatpush2.msra.mxu0 0.0
        %2314 = vmatprep.subr.mxu0 0.0
        %2315 = vmatpush2.msra.mxu0 0.0
        %2316 = vmatprep.subr.mxu0 0.0
        %2317 = vmatpush2.msra.mxu0 0.0
        %2318 = vmatprep.subr.mxu0 0.0
        %2319 = vmatpush2.msra.mxu0 0.0
        %2320 = vmatprep.subr.mxu0 0.0
        %2321 = vmatpush2.msra.mxu0 0.0
        %2322 = vmatprep.subr.mxu0 0.0
        %2323 = vmatpush2.msra.mxu0 0.0
        %2324 = vmatprep.subr.mxu0 0.0
        %2325 = vmatpush2.msra.mxu0 0.0
        %2326 = vmatprep.mubr.f32.mxu0 0.0
        %2327 = vmatmul.mubr.f32.gmra.mxu0 %v2260
        %v2328 = vpop.f32.mrf.mxu0
        %v2329 = vadd.f32 0.0, %v2328
        %v2330 = vpop.f32.mrf.mxu0
        %2331 = vdwg.mxu0
        %v2332 = vadd.f32 %v1925, %v2329
        %v2333 = vlaneseq
        %v2334 = vshrl.u32 %v2333, 7
        %v2335 = vsub.s32 1, %v2334
        %v2336 = vrot.slane %v432, %v2335
        %v2337 = vadd.f32 %v2332, %v2336
        %v2338 = vadd.f32 %v501, %v2337
        %2339 = vadd.xlane.f32.xlu0 %v2338
        %v2340 = vpop.xlane.xlu0 %2339
        %v2341 = vmul.f32 %v2340, 0.03125
        %v2342 = vsub.f32 %v2338, %v2341
        %v2343 = vsel %vm483, %v2342, 0.0
        %v2344 = vmul.f32 %v2343, %v2343
        %2345 = vadd.xlane.f32.xlu0 %v2344
        %v2346 = vpop.xlane.xlu0 %2345
        %v2347 = vmul.f32 %v2346, 0.03125
        %v2348 = vadd.f32 %v2347, 1e-05
        %v2349 = vrsqrt.pop %v2348
        %v2350 = vmul.f32 %v2343, %v2349
        %v2351 = vlaneseq
        %v2352 = vshrl.u32 %v2351, 7
        %v2353 = vsub.s32 4, %v2352
        %v2354 = vrot.slane %v431, %v2353
        %v2355 = vmul.f32 %v2350, %v2354
        %v2356 = vlaneseq
        %v2357 = vshrl.u32 %v2356, 7
        %v2358 = vsub.s32 5, %v2357
        %v2359 = vrot.slane %v431, %v2358
        %v2360 = vadd.f32 %v2355, %v2359
        %2361 = vst [vmem:[%s428] sm:$0xff] %v2360
        %s2362 = sand.u32 %s199, 1
        %s2363 = scalar_lea.sflag [#allocation4], %s2362
        %s2364 = sand.u32 %s199, 1
        %s2365 = smul.addr %s2364, 8
        %s2366 = scalar_lea.vmem [#allocation14], %s2365
        // Predicated region
        $region77: #{tpu_custom_call.1} parent=47 // pred_check
          %p2367 = pneg %p209
        $region78: #{tpu_custom_call.1} parent=47 // pred_check_branch
          %2369 = sbr.rel (%p2367) target = $region80
        $region79: #{tpu_custom_call.1} parent=47 // pred_region
          %s2371 = ssub.s32 128, 128
          %2372 = vsyncadd %s2363, %s2371
          %s2373 = smul.addr %s29, 128
          %s2374 = scalar_lea.hbm %s7, %s2373
          %s2376 = sshll.u32 %s2366, 4
          %s2377 = int_to_ptr.vmem [resolvable:$true] %s2376
          %2379 = dma.vmem_to_hbm [thread:$0]  %s2377, 128, %s2374, %s2363
        $region80: #{tpu_custom_call.1} parent=47 // pred_fallthru
          _
      $region48: #{tpu_custom_call.1} parent=5 // pred_fallthru
        _
      %p2380 = scmp.le.s32.totalorder 2, %s24
      // Predicated region
      $region81: #{tpu_custom_call.1} parent=5 // pred_check
        %p2381 = pneg %p2380
      $region82: #{tpu_custom_call.1} parent=5 // pred_check_branch
        %2383 = sbr.rel (%p2381) target = $region84
      $region83: #{tpu_custom_call.1} parent=5 // pred_region
        %s2384 = ssub.s32 %s24, 2
        // Predicated region
        $region85: #{tpu_custom_call.1} parent=83 // pred_check
          %p2385 = pneg %p215
        $region86: #{tpu_custom_call.1} parent=83 // pred_check_branch
          %2387 = sbr.rel (%p2385) target = $region88
        $region87: #{tpu_custom_call.1} parent=83 // pred_region
          %s2388 = sand.u32 %s200, 1
          %s2389 = scalar_lea.sflag [#allocation4], %s2388
          %s2390 = sand.u32 %s200, 1
          %s2391 = smul.addr %s2390, 8
          %s2392 = scalar_lea.vmem [#allocation14], %s2391
          %2393 = dma.done %s2389, 128
        $region88: #{tpu_custom_call.1} parent=83 // pred_fallthru
          _
      $region84: #{tpu_custom_call.1} parent=5 // pred_fallthru
        _
    $region6: #{tpu_custom_call.1} parent=1 // loop_footer
      %s28 = sadd.s32 1, %s24
    $region7: #{tpu_custom_call.1} parent=1 // loop_footer_branch
      %23 = sbr.rel target = $region3
    $region8: #{tpu_custom_call.1} parent=1 // loop_exit
      _
    %2394 = vsyncpa [#allocation3], 1
    %s2395 = scalar_lea.sflag [#allocation3], 1
    %2396 = vsyncpa %s2395, 1
    %2397 = vsyncpa [#allocation6], 1
    %s2398 = scalar_lea.sflag [#allocation6], 1
    %2399 = vsyncpa %s2398, 1
    %2400 = vsyncpa [#allocation9], 1
    %2401 = vsyncpa [#allocation12], 1
    %2402 = vsyncpa [#allocation4], 1
    %s2403 = scalar_lea.sflag [#allocation4], 1
    %2404 = vsyncpa %s2403, 1

</llo_original>
